<compile_context>
chip_gen: v7x
topology: tpu7x:2x2x1
jax: 0.10.0
libtpu: 0.0.40
codegen_flags: <defaults>
</compile_context>

<pallas_src>
import functools

import jax
import jax.numpy as jnp
from jax.experimental import pallas as pl
from jax.experimental.pallas import tpu as pltpu

LEAKY_SLOPE = 0.1   # darknet LeakyReLU slope
BN_EPS = 1e-5       # nn.BatchNorm2d default eps
LANES = 128


def _round_up(x, m):
    return ((x + m - 1) // m) * m


def _largest_div(x, cap, quantum=LANES):
    """Largest multiple of `quantum` that divides x and is <= cap."""
    best = quantum
    d = quantum
    top = min(x, cap)
    while d <= top:
        if x % d == 0:
            best = d
        d += quantum
    return best


@functools.lru_cache(maxsize=1)
def _vmem_budget():
    """Generation-aware VMEM budget (bytes): ~3/4 of physical VMEM.
    v5e/v6e (128 MiB) -> 96 MiB, v7x (64 MiB) -> 48 MiB."""
    cap = 64 * 1024 * 1024   # conservative default = v7x physical VMEM
    try:
        info = pltpu.get_tpu_info()
        cap = int(getattr(info, "vmem_capacity_bytes", cap))
    except Exception:
        pass
    return int(cap * 3 // 4)


# ----------------------------- Pallas kernels ------------------------------

def _conv_mm_kernel(alpha, has_res, p_ref, w_ref, b_ref, *rest):
    """One (tm,tk) x (tk,tn) MXU step with f32 accumulation in VMEM scratch.

    k (innermost grid axis) tiles the contraction; at k==0 the accumulator is
    zeroed, at k==last the fused epilogue runs:
        y = acc + shift              (BN scale already folded into weights)
        y = leaky_relu(y)            (if the conv activation is 'leaky')
        y = y + residual             (darknet shortcut adds the ACTIVATED out)
    """
    if has_res:
        r_ref, o_ref, acc_ref = rest
    else:
        r_ref = None
        o_ref, acc_ref = rest

    k = pl.program_id(2)

    @pl.when(k == 0)
    def _():
        acc_ref[...] = jnp.zeros_like(acc_ref)

    acc_ref[...] += jnp.dot(p_ref[...], w_ref[...],
                            preferred_element_type=jnp.float32)

    @pl.when(k == pl.num_programs(2) - 1)
    def _():
        y = acc_ref[...] + b_ref[...]
        if alpha != 1.0:
            y = jnp.maximum(y, alpha * y)          # leaky ReLU, one VPU max
        if has_res:
            y = y + r_ref[...].astype(jnp.float32)  # residual AFTER activation
        o_ref[...] = y.astype(o_ref.dtype)


def _tile_bytes(tm, tk, tn, has_res, out_itemsize):
    b = 2 * tm * tk * 2            # bf16 patch tile, double-buffered
    b += 2 * tk * tn * 2           # bf16 weight tile (worst case double-buf)
    b += 2 * tn * 4                # shift
    b += tm * tn * 4               # f32 accumulator scratch
    b += 2 * tm * tn * out_itemsize
    if has_res:
        b += 2 * tm * tn * 2       # bf16 residual tile
    return b


def _pick_tiles(M, K, OC, has_res, out_itemsize, budget):
    """(tm, Mp, tn, OCp, tk, Kp) sized for the current chip's VMEM budget."""
    OCp = _round_up(OC, LANES)
    tn = _largest_div(OCp, cap=512)      # 256/512-wide N feeds v6e/v7x MXU
    if K <= 2048:
        Kp, tk = K, K                    # contraction fits in one tile
    else:
        Kp = _round_up(K, LANES)
        tk = _largest_div(Kp, cap=2048)
    avail = max(budget - (4 << 20), 2 << 20)
    cands = [t for t in (1024, 512, 256, 128)
             if _tile_bytes(t, tk, tn, has_res, out_itemsize) <= avail]
    if not cands:
        cands = [128]

    def score(t):
        mp = _round_up(M, t)
        steps = mp // t
        return (mp - M,                      # least padding first
                0 if steps >= 2 else 1,      # prefer >=2 M steps (pipeline/megacore)
                -t)                          # then biggest tile
    tm = min(cands, key=score)
    return tm, _round_up(M, tm), tn, OCp, tk, Kp


def conv_matmul(patches, w2, shift, alpha, residual=None,
                out_dtype=jnp.bfloat16):
    """patches: (M, K).  w2: (K, OC) f32 with the BN scale folded in.
    shift: (OC,) f32.  residual: optional (M, OC), added AFTER the activation
    (darknet shortcut semantics).  Returns (M, OC) out_dtype."""
    M, K = patches.shape
    OC = w2.shape[1]
    has_res = residual is not None
    budget = _vmem_budget()
    out_itemsize = jnp.dtype(out_dtype).itemsize
    tm, Mp, tn, OCp, tk, Kp = _pick_tiles(M, K, OC, has_res, out_itemsize,
                                          budget)

    p = patches.astype(jnp.bfloat16)
    if Kp != K:
        p = jnp.pad(p, ((0, 0), (0, Kp - K)))
    if Mp != M:
        p = jnp.pad(p, ((0, Mp - M), (0, 0)))

    wq = w2
    if Kp != K or OCp != OC:
        wq = jnp.pad(wq, ((0, Kp - K), (0, OCp - OC)))
    wq = wq.astype(jnp.bfloat16)

    sh = shift.reshape(1, OC).astype(jnp.float32)
    if OCp != OC:
        sh = jnp.pad(sh, ((0, 0), (0, OCp - OC)))

    inputs = [p, wq, sh]
    if has_res:
        r = residual.astype(jnp.bfloat16)
        if OCp != OC:
            r = jnp.pad(r, ((0, 0), (0, OCp - OC)))
        if Mp != M:
            r = jnp.pad(r, ((0, Mp - M), (0, 0)))
        inputs.append(r)

    grid = (Mp // tm, OCp // tn, Kp // tk)
    w_invariant = (grid[1] == 1 and grid[2] == 1)   # weight index constant
    s_invariant = (grid[1] == 1)                    # shift index constant

    def build(single_buffer_invariants):
        def spec(shape, imap, invariant):
            if single_buffer_invariants and invariant:
                # Grid-invariant blocks do not need a second pipeline buffer.
                return pl.BlockSpec(shape, imap, pipeline_mode=pl.Buffered(1))
            return pl.BlockSpec(shape, imap)

        in_specs = [
            pl.BlockSpec((tm, tk), lambda i, j, k: (i, k)),
            spec((tk, tn), lambda i, j, k: (k, j), w_invariant),
            spec((1, tn), lambda i, j, k: (0, j), s_invariant),
        ]
        if has_res:
            in_specs.append(pl.BlockSpec((tm, tn), lambda i, j, k: (i, j)))
        return pl.pallas_call(
            functools.partial(_conv_mm_kernel, float(alpha), has_res),
            out_shape=jax.ShapeDtypeStruct((Mp, OCp), out_dtype),
            grid=grid,
            in_specs=in_specs,
            out_specs=pl.BlockSpec((tm, tn), lambda i, j, k: (i, j)),
            scratch_shapes=[pltpu.VMEM((tm, tn), jnp.float32)],
            compiler_params=pltpu.CompilerParams(
                dimension_semantics=("parallel", "parallel", "arbitrary"),
                vmem_limit_bytes=budget),
        )

    if w_invariant or s_invariant:
        try:
            out = build(True)(*inputs)
        except Exception:   # pipeline_mode/Buffered(1) unsupported -> fallback
            out = build(False)(*inputs)
    else:
        out = build(False)(*inputs)

    if Mp != M or OCp != OC:
        # TODO(synk): carry OCp-padded channels between layers (zero-pad the
        # next layer's weight K rows instead) to eliminate this slice copy.
        out = out[:M, :OC]
    return out


def _add_kernel(a_ref, b_ref, o_ref):
    o_ref[...] = a_ref[...] + b_ref[...]


def shortcut_add(a, b):
    """Fallback residual add (only when the add cannot be fused into the
    preceding conv's epilogue).  Lane-dense (rows, 128) layout, ~1 MiB tiles."""
    shape, dtype, total = a.shape, a.dtype, a.size
    rows_needed = -(-total // LANES)
    tr = min(2048, max(8, _round_up(rows_needed, 8)))
    chunk = tr * LANES
    padded = _round_up(total, chunk)
    af = jnp.pad(a.reshape(-1), (0, padded - total)).reshape(-1, LANES)
    bf = jnp.pad(b.astype(dtype).reshape(-1), (0, padded - total)).reshape(-1, LANES)
    rows = af.shape[0]
    out = pl.pallas_call(
        _add_kernel,
        out_shape=jax.ShapeDtypeStruct((rows, LANES), dtype),
        grid=(rows // tr,),
        in_specs=[pl.BlockSpec((tr, LANES), lambda i: (i, 0)),
                  pl.BlockSpec((tr, LANES), lambda i: (i, 0))],
        out_specs=pl.BlockSpec((tr, LANES), lambda i: (i, 0)),
        compiler_params=pltpu.CompilerParams(
            dimension_semantics=("parallel",)),
    )(af, bf)
    return out.reshape(-1)[:total].reshape(shape)


# ------------------------------- conv wrapper -------------------------------

def conv_block(x, w, scale, shift, stride, pad, alpha, residual=None,
               out_dtype=jnp.bfloat16):
    """x: NHWC.  w: (OC, C, kh, kw) PyTorch layout.  residual: NHWC or None
    (added after the activation).  Returns NHWC."""
    N, H, W, C = x.shape
    OC, _, kh, kw = w.shape
    xb = x.astype(jnp.bfloat16)
    OH = (H + 2 * pad - kh) // stride + 1
    OW = (W + 2 * pad - kw) // stride + 1
    if kh == 1 and kw == 1 and stride == 1 and pad == 0:
        patches = xb.reshape(N * H * W, C)
    else:
        xp = jnp.pad(xb, ((0, 0), (pad, pad), (pad, pad), (0, 0))) if pad else xb
        # TODO(synk): for large-resolution 3x3 layers, build the patches
        # in-kernel (tap-axis reduction over a VMEM-resident NHWC tile) instead
        # of materializing the (M, kh*kw*C) im2col matrix in HBM.
        cols = []
        for dy in range(kh):
            for dx in range(kw):
                cols.append(xp[:, dy:dy + stride * OH:stride,
                               dx:dx + stride * OW:stride, :])
        patches = cols[0] if len(cols) == 1 else jnp.concatenate(cols, axis=-1)
        patches = patches.reshape(N * OH * OW, kh * kw * C)
    # (OC,C,kh,kw) -> (kh,kw,C,OC) -> (K,OC), matching patch feature ordering;
    # fold the BN scale into the weights so the kernel epilogue is acc + shift.
    w2 = jnp.transpose(w, (2, 3, 1, 0)).reshape(kh * kw * C, OC)
    w2 = w2 * scale[None, :]
    res2 = None
    if residual is not None:
        res2 = residual.reshape(N * OH * OW, OC)
    out = conv_matmul(patches, w2, shift, alpha, res2, out_dtype=out_dtype)
    return out.reshape(N, OH, OW, OC)


# ---------------------------- yolo head (glue) -------------------------------

def predict_transform(x, inp_dim, anchors, num_classes):
    """Standard YOLOv3 predict_transform, consuming NHWC: x is (N,G,G,A*attrs)."""
    x = x.astype(jnp.float32)
    N, G = x.shape[0], x.shape[1]
    stride = inp_dim // G
    A = len(anchors)
    attrs = 5 + num_classes
    p = x.reshape(N, G * G * A, attrs)
    anc = jnp.asarray(anchors, jnp.float32) / float(stride)          # (A, 2)
    gx, gy = jnp.meshgrid(jnp.arange(G, dtype=jnp.float32),
                          jnp.arange(G, dtype=jnp.float32))          # 'xy'
    offs = jnp.stack([gx.reshape(-1), gy.reshape(-1)], axis=-1)      # (G*G, 2)
    offs = jnp.repeat(offs, A, axis=0)[None]                         # (1,GGA,2)
    anc_t = jnp.tile(anc, (G * G, 1))[None]                          # (1,GGA,2)
    xy = jax.nn.sigmoid(p[..., 0:2]) + offs
    wh = jnp.exp(p[..., 2:4]) * anc_t
    obj = jax.nn.sigmoid(p[..., 4:5])
    cls = jax.nn.sigmoid(p[..., 5:])
    return jnp.concatenate([xy * stride, wh * stride, obj, cls], axis=-1)


# ------------------------- config / params / forward -------------------------

def build_blocks():
    """Mini darknet config (equivalent of parse_config output)."""
    def conv(filters, size, stride, pad, bn, act):
        return {'arch': 'convolutional', 'filters': filters, 'size': size,
                'stride': stride, 'pad': pad, 'batch_normalize': bn,
                'activation': act}
    blocks = [{'arch': 'net', 'height': 16, 'width': 16, 'channels': 4}]
    blocks += [
        conv(8, 3, 1, 1, 1, 'leaky'),                        # 0  16x16x8
        conv(16, 3, 2, 1, 1, 'leaky'),                       # 1   8x8x16
        conv(8, 1, 1, 0, 1, 'leaky'),                        # 2   8x8x8
        conv(16, 3, 1, 1, 1, 'leaky'),                       # 3   8x8x16
        {'arch': 'shortcut', 'from': -3},                    # 4   8x8x16
        conv(21, 1, 1, 0, 0, 'linear'),                      # 5   8x8x21
        {'arch': 'yolo', 'classes': 2,
         'anchors': [(2.0, 3.0), (4.0, 5.0), (6.0, 8.0)]},   # 6
        {'arch': 'route', 'layers': [-3]},                   # 7   8x8x16
        conv(8, 1, 1, 0, 1, 'leaky'),                        # 8   8x8x8
        {'arch': 'upsample', 'stride': 2},                   # 9  16x16x8
        {'arch': 'route', 'layers': [-1, -10]},              # 10 16x16x16
        conv(21, 1, 1, 0, 0, 'linear'),                      # 11 16x16x21
        {'arch': 'yolo', 'classes': 2,
         'anchors': [(1.0, 1.5), (2.0, 2.5), (3.0, 3.5)]},   # 12
    ]
    return blocks


def init_params(blocks, key):
    """Deterministic synthetic parameters; BN folded into scale/shift."""
    params = {}
    out_ch = {}
    prev = int(blocks[0]['channels'])
    for idx, m in enumerate(blocks[1:]):
        arch = m['arch']
        if arch == 'convolutional':
            c_in, oc, k = prev, m['filters'], m['size']
            key, kw_, kb, kg, km, kv = jax.random.split(key, 6)
            w = 0.1 * jax.random.normal(kw_, (oc, c_in, k, k), jnp.float32)
            if m['batch_normalize']:
                gamma = 1.0 + 0.1 * jax.random.normal(kg, (oc,), jnp.float32)
                beta = 0.1 * jax.random.normal(kb, (oc,), jnp.float32)
                mean = 0.1 * jax.random.normal(km, (oc,), jnp.float32)
                var = jax.random.uniform(kv, (oc,), jnp.float32, 0.5, 1.5)
                scale = gamma / jnp.sqrt(var + BN_EPS)
                shift = beta - mean * scale
            else:
                bias = 0.1 * jax.random.normal(kb, (oc,), jnp.float32)
                scale = jnp.ones((oc,), jnp.float32)
                shift = bias
            params[idx] = {'w': w, 'scale': scale, 'shift': shift}
            prev = oc
            out_ch[idx] = oc
        elif arch in ('upsample', 'shortcut', 'yolo'):
            out_ch[idx] = prev
        elif arch == 'route':
            layers = [int(l) for l in m['layers']]
            total = 0
            for l in layers:
                if l > 0:
                    l = l - idx
                total += out_ch[idx + l]
            prev = total
            out_ch[idx] = prev
    return params


def _collect_feature_refs(modules):
    """Feature indices referenced by route/shortcut layers (used to decide
    whether a shortcut may be fused into the preceding conv's epilogue)."""
    refs = set()
    for idx, m in enumerate(modules):
        if m['arch'] == 'route':
            for l in m['layers']:
                l = int(l)
                if l > 0:
                    l = l - idx
                refs.add(idx + l)
        elif m['arch'] == 'shortcut':
            refs.add(idx + int(m['from']))
    return refs


def darknet_forward(x_nchw, blocks, params):
    modules = blocks[1:]
    in_dim = int(blocks[0]['height'])
    feature_refs = _collect_feature_refs(modules)

    x = jnp.transpose(x_nchw, (0, 2, 3, 1)).astype(jnp.bfloat16)  # NHWC, bf16
    features = {}
    detections = None
    fused_shortcuts = set()

    for idx, module in enumerate(modules):
        if idx in fused_shortcuts:
            features[idx] = x                    # residual already fused
            continue
        layer = module['arch']
        if layer == 'convolutional':
            p = params[idx]
            alpha = LEAKY_SLOPE if module['activation'] == 'leaky' else 1.0
            residual = None
            nxt = idx + 1
            # Fuse a following shortcut (out = act(conv) + residual) when the
            # raw conv output is not referenced by any other route/shortcut.
            if (nxt < len(modules) and modules[nxt]['arch'] == 'shortcut'
                    and idx not in feature_refs):
                origin = int(modules[nxt]['from'])
                residual = features[nxt + origin]
                fused_shortcuts.add(nxt)
            feeds_yolo = nxt < len(modules) and modules[nxt]['arch'] == 'yolo'
            out_dtype = jnp.float32 if feeds_yolo else jnp.bfloat16
            x = conv_block(x, p['w'], p['scale'], p['shift'],
                           int(module['stride']), int(module['pad']), alpha,
                           residual=residual, out_dtype=out_dtype)
            features[idx] = x
        elif layer == 'upsample':
            s = int(module['stride'])
            N, H, W, C = x.shape
            x = jnp.broadcast_to(x[:, :, None, :, None, :],
                                 (N, H, s, W, s, C)).reshape(N, H * s, W * s, C)
            features[idx] = x
        elif layer == 'shortcut':
            origin = int(module['from'])
            x = shortcut_add(features[idx - 1], features[idx + origin])
            features[idx] = x
        elif layer == 'route':
            layers = [int(l) for l in module['layers']]
            if layers[0] > 0:
                layers[0] = layers[0] - idx
            if len(layers) == 1:
                x = features[idx + layers[0]]
            else:
                if layers[1] > 0:
                    layers[1] = layers[1] - idx
                m1 = features[idx + layers[0]]
                m2 = features[idx + layers[1]]
                x = jnp.concatenate((m1, m2), axis=-1)   # channels last (NHWC)
            features[idx] = x
        elif layer == 'yolo':
            anchors = module['anchors']
            num_classes = int(module['classes'])
            d = predict_transform(x, in_dim, anchors, num_classes)
            detections = d if detections is None else jnp.concatenate(
                (detections, d), axis=1)
            features[idx] = features[idx - 1]
    return detections


# ----------------------- pure-JAX f32 reference forward ----------------------

def reference_forward(x_nchw, blocks, params):
    """Pure-JAX f32 reference (lax.conv) mirroring the PyTorch forward."""
    modules = blocks[1:]
    in_dim = int(blocks[0]['height'])
    x = jnp.transpose(x_nchw, (0, 2, 3, 1)).astype(jnp.float32)
    features = {}
    detections = None
    for idx, module in enumerate(modules):
        layer = module['arch']
        if layer == 'convolutional':
            p = params[idx]
            stride = int(module['stride'])
            pad = int(module['pad'])
            y = jax.lax.conv_general_dilated(
                x, jnp.transpose(p['w'], (2, 3, 1, 0)),
                window_strides=(stride, stride),
                padding=[(pad, pad), (pad, pad)],
                dimension_numbers=('NHWC', 'HWIO', 'NHWC'))
            y = y * p['scale'] + p['shift']
            if module['activation'] == 'leaky':
                y = jnp.where(y >= 0, y, LEAKY_SLOPE * y)
            x = y
            features[idx] = x
        elif layer == 'upsample':
            s = int(module['stride'])
            N, H, W, C = x.shape
            x = jnp.broadcast_to(x[:, :, None, :, None, :],
                                 (N, H, s, W, s, C)).reshape(N, H * s, W * s, C)
            features[idx] = x
        elif layer == 'shortcut':
            x = features[idx - 1] + features[idx + int(module['from'])]
            features[idx] = x
        elif layer == 'route':
            layers = [int(l) for l in module['layers']]
            if layers[0] > 0:
                layers[0] = layers[0] - idx
            if len(layers) == 1:
                x = features[idx + layers[0]]
            else:
                if layers[1] > 0:
                    layers[1] = layers[1] - idx
                x = jnp.concatenate((features[idx + layers[0]],
                                     features[idx + layers[1]]), axis=-1)
            features[idx] = x
        elif layer == 'yolo':
            d = predict_transform(x, in_dim, module['anchors'],
                                  int(module['classes']))
            detections = d if detections is None else jnp.concatenate(
                (detections, d), axis=1)
            features[idx] = features[idx - 1]
    return detections


# ----------------------------------- main ------------------------------------

if __name__ == "__main__":
    blocks = build_blocks()
    key = jax.random.PRNGKey(0)
    key, kp, kx = jax.random.split(key, 3)
    params = init_params(blocks, kp)

    x = jax.random.normal(kx, (2, 4, 16, 16), jnp.float32)  # NCHW like PyTorch

    out = darknet_forward(x, blocks, params)
    out = jax.block_until_ready(out)

    expected = (2, 8 * 8 * 3 + 16 * 16 * 3, 5 + 2)  # (2, 960, 7)
    assert out.shape == expected, (out.shape, expected)
    assert bool(jnp.all(jnp.isfinite(out)))

    # Pure-JAX f32 reference; tolerance covers the bf16 MXU / bf16-activation
    # path and validates the fused BN+activation+shortcut epilogue ordering.
    ref = reference_forward(x, blocks, params)
    assert bool(jnp.allclose(out, ref, rtol=0.15, atol=0.1)), (
        "max abs err", float(jnp.max(jnp.abs(out - ref))))

    print("KERNEL_OK")
</pallas_src>

<mosaic_0001>
module attributes {stable_mosaic.version = 11 : i64} {
  func.func @_conv_mm_kernel(%arg0: i32, %arg1: i32, %arg2: i32, %arg3: memref<256x36xbf16, #tpu.memory_space<vmem>>, %arg4: memref<36x128xbf16, #tpu.memory_space<vmem>>, %arg5: memref<1x128xf32, #tpu.memory_space<vmem>>, %arg6: memref<256x128xbf16, #tpu.memory_space<vmem>>, %arg7: memref<256x128xf32, #tpu.memory_space<vmem>>) attributes {dimension_semantics = [#tpu.dimension_semantics<parallel>, #tpu.dimension_semantics<parallel>, #tpu.dimension_semantics<arbitrary>], iteration_bounds = array<i64: 2, 1, 1>, scalar_prefetch = 0 : i64, scratch_operands = 1 : i64, tpu.core_type = #tpu.core_type<tc>, window_params = [{transform_indices = @transform_0, window_bounds = array<i64: 256, 36>}, {pipeline_mode = #tpu.pipeline_mode<synchronous>, transform_indices = @transform_1, window_bounds = array<i64: 36, 128>}, {pipeline_mode = #tpu.pipeline_mode<synchronous>, transform_indices = @transform_2, window_bounds = array<i64: 1, 128>}, {transform_indices = @transform_3, window_bounds = array<i64: 256, 128>}]} {
    %c0_i32 = arith.constant 0 : i32
    %0 = arith.cmpi eq, %arg2, %c0_i32 : i32
    %1 = arith.extui %0 : i1 to i32
    %c0_i32_0 = arith.constant 0 : i32
    %2 = arith.cmpi ne, %1, %c0_i32_0 : i32
    scf.if %2 {
      %cst_10 = arith.constant 0.000000e+00 : f32
      %12 = vector.broadcast %cst_10 : f32 to vector<256x128xf32>
      %c0_11 = arith.constant 0 : index
      %c0_12 = arith.constant 0 : index
      %13 = vector.load %arg7[%c0_11, %c0_12] : memref<256x128xf32, #tpu.memory_space<vmem>>, vector<256x128xf32>
      tpu.vector_store %arg7[%c0_11, %c0_12], %12 {strides = array<i32>} : memref<256x128xf32, #tpu.memory_space<vmem>>, vector<256x128xf32>,
    } else {
    }
    %c0 = arith.constant 0 : index
    %c0_1 = arith.constant 0 : index
    %3 = vector.load %arg7[%c0, %c0_1] : memref<256x128xf32, #tpu.memory_space<vmem>>, vector<256x128xf32>
    %c0_2 = arith.constant 0 : index
    %c0_3 = arith.constant 0 : index
    %4 = vector.load %arg3[%c0_2, %c0_3] : memref<256x36xbf16, #tpu.memory_space<vmem>>, vector<256x36xbf16>
    %c0_4 = arith.constant 0 : index
    %c0_5 = arith.constant 0 : index
    %5 = vector.load %arg4[%c0_4, %c0_5] : memref<36x128xbf16, #tpu.memory_space<vmem>>, vector<36x128xbf16>
    %cst = arith.constant dense<0.000000e+00> : vector<256x128xf32>
    %6 = tpu.matmul %4, %5, %cst {dimension_numbers = #tpu.dot_dimension_numbers<[1], [0], [0], [1], [0, 0, 1, 1], [], []>} : vector<256x36xbf16>, vector<36x128xbf16>, vector<256x128xf32> -> vector<256x128xf32>
    %7 = arith.addf %3, %6 : vector<256x128xf32>
    %c0_6 = arith.constant 0 : index
    %c0_7 = arith.constant 0 : index
    %8 = vector.load %arg7[%c0_6, %c0_7] : memref<256x128xf32, #tpu.memory_space<vmem>>, vector<256x128xf32>
    tpu.vector_store %arg7[%c0_6, %c0_7], %7 {strides = array<i32>} : memref<256x128xf32, #tpu.memory_space<vmem>>, vector<256x128xf32>,
    %c0_i32_8 = arith.constant 0 : i32
    %9 = arith.cmpi eq, %arg2, %c0_i32_8 : i32
    %10 = arith.extui %9 : i1 to i32
    %c0_i32_9 = arith.constant 0 : i32
    %11 = arith.cmpi ne, %10, %c0_i32_9 : i32
    scf.if %11 {
      %c0_10 = arith.constant 0 : index
      %c0_11 = arith.constant 0 : index
      %12 = vector.load %arg7[%c0_10, %c0_11] : memref<256x128xf32, #tpu.memory_space<vmem>>, vector<256x128xf32>
      %c0_12 = arith.constant 0 : index
      %c0_13 = arith.constant 0 : index
      %13 = vector.load %arg5[%c0_12, %c0_13] : memref<1x128xf32, #tpu.memory_space<vmem>>, vector<1x128xf32>
      %14 = vector.broadcast %13 : vector<1x128xf32> to vector<256x128xf32>
      %15 = arith.addf %12, %14 : vector<256x128xf32>
      %cst_14 = arith.constant 1.000000e-01 : f32
      %16 = vector.broadcast %cst_14 : f32 to vector<256x128xf32>
      %17 = arith.mulf %16, %15 : vector<256x128xf32>
      %18 = arith.maximumf %15, %17 : vector<256x128xf32>
      %19 = arith.truncf %18 : vector<256x128xf32> to vector<256x128xbf16>
      %c0_15 = arith.constant 0 : index
      %c0_16 = arith.constant 0 : index
      %20 = vector.load %arg6[%c0_15, %c0_16] : memref<256x128xbf16, #tpu.memory_space<vmem>>, vector<256x128xbf16>
      tpu.vector_store %arg6[%c0_15, %c0_16], %19 {strides = array<i32>} : memref<256x128xbf16, #tpu.memory_space<vmem>>, vector<256x128xbf16>,
    } else {
    }
    return
  }
  func.func @transform_0(%arg0: i32, %arg1: i32, %arg2: i32) -> (i32, i32) {
    %c0_i32 = arith.constant 0 : i32
    return %arg0, %arg2 : i32, i32
  }
  func.func @transform_1(%arg0: i32, %arg1: i32, %arg2: i32) -> (i32, i32) {
    %c0_i32 = arith.constant 0 : i32
    return %arg2, %arg1 : i32, i32
  }
  func.func @transform_2(%arg0: i32, %arg1: i32, %arg2: i32) -> (i32, i32) {
    %c0_i32 = arith.constant 0 : i32
    %c0_i32_0 = arith.constant 0 : i32
    return %c0_i32, %arg1 : i32, i32
  }
  func.func @transform_3(%arg0: i32, %arg1: i32, %arg2: i32) -> (i32, i32) {
    %c0_i32 = arith.constant 0 : i32
    return %arg0, %arg1 : i32, i32
  }
}

module attributes {stable_mosaic.version = 11 : i64} {
  func.func @_conv_mm_kernel(%arg0: i32, %arg1: i32, %arg2: i32, %arg3: memref<256x36xbf16, #tpu.memory_space<vmem>>, %arg4: memref<36x128xbf16, #tpu.memory_space<vmem>>, %arg5: memref<1x128xf32, #tpu.memory_space<vmem>>, %arg6: memref<256x128xbf16, #tpu.memory_space<vmem>>, %arg7: memref<256x128xf32, #tpu.memory_space<vmem>>) attributes {dimension_semantics = [#tpu.dimension_semantics<parallel>, #tpu.dimension_semantics<parallel>, #tpu.dimension_semantics<arbitrary>], iteration_bounds = array<i64: 2, 1, 1>, scalar_prefetch = 0 : i64, scratch_operands = 1 : i64, tpu.core_type = #tpu.core_type<tc>, window_params = [{transform_indices = @transform_0, window_bounds = array<i64: 256, 36>}, {transform_indices = @transform_1, window_bounds = array<i64: 36, 128>}, {transform_indices = @transform_2, window_bounds = array<i64: 1, 128>}, {transform_indices = @transform_3, window_bounds = array<i64: 256, 128>}]} {
    %c0_i32 = arith.constant 0 : i32
    %0 = arith.cmpi eq, %arg2, %c0_i32 : i32
    %1 = arith.extui %0 : i1 to i32
    %c0_i32_0 = arith.constant 0 : i32
    %2 = arith.cmpi ne, %1, %c0_i32_0 : i32
    scf.if %2 {
      %cst_10 = arith.constant 0.000000e+00 : f32
      %12 = vector.broadcast %cst_10 : f32 to vector<256x128xf32>
      %c0_11 = arith.constant 0 : index
      %c0_12 = arith.constant 0 : index
      %13 = vector.load %arg7[%c0_11, %c0_12] : memref<256x128xf32, #tpu.memory_space<vmem>>, vector<256x128xf32>
      tpu.vector_store %arg7[%c0_11, %c0_12], %12 {strides = array<i32>} : memref<256x128xf32, #tpu.memory_space<vmem>>, vector<256x128xf32>,
    } else {
    }
    %c0 = arith.constant 0 : index
    %c0_1 = arith.constant 0 : index
    %3 = vector.load %arg7[%c0, %c0_1] : memref<256x128xf32, #tpu.memory_space<vmem>>, vector<256x128xf32>
    %c0_2 = arith.constant 0 : index
    %c0_3 = arith.constant 0 : index
    %4 = vector.load %arg3[%c0_2, %c0_3] : memref<256x36xbf16, #tpu.memory_space<vmem>>, vector<256x36xbf16>
    %c0_4 = arith.constant 0 : index
    %c0_5 = arith.constant 0 : index
    %5 = vector.load %arg4[%c0_4, %c0_5] : memref<36x128xbf16, #tpu.memory_space<vmem>>, vector<36x128xbf16>
    %cst = arith.constant dense<0.000000e+00> : vector<256x128xf32>
    %6 = tpu.matmul %4, %5, %cst {dimension_numbers = #tpu.dot_dimension_numbers<[1], [0], [0], [1], [0, 0, 1, 1], [], []>} : vector<256x36xbf16>, vector<36x128xbf16>, vector<256x128xf32> -> vector<256x128xf32>
    %7 = arith.addf %3, %6 : vector<256x128xf32>
    %c0_6 = arith.constant 0 : index
    %c0_7 = arith.constant 0 : index
    %8 = vector.load %arg7[%c0_6, %c0_7] : memref<256x128xf32, #tpu.memory_space<vmem>>, vector<256x128xf32>
    tpu.vector_store %arg7[%c0_6, %c0_7], %7 {strides = array<i32>} : memref<256x128xf32, #tpu.memory_space<vmem>>, vector<256x128xf32>,
    %c0_i32_8 = arith.constant 0 : i32
    %9 = arith.cmpi eq, %arg2, %c0_i32_8 : i32
    %10 = arith.extui %9 : i1 to i32
    %c0_i32_9 = arith.constant 0 : i32
    %11 = arith.cmpi ne, %10, %c0_i32_9 : i32
    scf.if %11 {
      %c0_10 = arith.constant 0 : index
      %c0_11 = arith.constant 0 : index
      %12 = vector.load %arg7[%c0_10, %c0_11] : memref<256x128xf32, #tpu.memory_space<vmem>>, vector<256x128xf32>
      %c0_12 = arith.constant 0 : index
      %c0_13 = arith.constant 0 : index
      %13 = vector.load %arg5[%c0_12, %c0_13] : memref<1x128xf32, #tpu.memory_space<vmem>>, vector<1x128xf32>
      %14 = vector.broadcast %13 : vector<1x128xf32> to vector<256x128xf32>
      %15 = arith.addf %12, %14 : vector<256x128xf32>
      %cst_14 = arith.constant 1.000000e-01 : f32
      %16 = vector.broadcast %cst_14 : f32 to vector<256x128xf32>
      %17 = arith.mulf %16, %15 : vector<256x128xf32>
      %18 = arith.maximumf %15, %17 : vector<256x128xf32>
      %19 = arith.truncf %18 : vector<256x128xf32> to vector<256x128xbf16>
      %c0_15 = arith.constant 0 : index
      %c0_16 = arith.constant 0 : index
      %20 = vector.load %arg6[%c0_15, %c0_16] : memref<256x128xbf16, #tpu.memory_space<vmem>>, vector<256x128xbf16>
      tpu.vector_store %arg6[%c0_15, %c0_16], %19 {strides = array<i32>} : memref<256x128xbf16, #tpu.memory_space<vmem>>, vector<256x128xbf16>,
    } else {
    }
    return
  }
  func.func @transform_0(%arg0: i32, %arg1: i32, %arg2: i32) -> (i32, i32) {
    %c0_i32 = arith.constant 0 : i32
    return %arg0, %arg2 : i32, i32
  }
  func.func @transform_1(%arg0: i32, %arg1: i32, %arg2: i32) -> (i32, i32) {
    %c0_i32 = arith.constant 0 : i32
    return %arg2, %arg1 : i32, i32
  }
  func.func @transform_2(%arg0: i32, %arg1: i32, %arg2: i32) -> (i32, i32) {
    %c0_i32 = arith.constant 0 : i32
    %c0_i32_0 = arith.constant 0 : i32
    return %c0_i32, %arg1 : i32, i32
  }
  func.func @transform_3(%arg0: i32, %arg1: i32, %arg2: i32) -> (i32, i32) {
    %c0_i32 = arith.constant 0 : i32
    return %arg0, %arg1 : i32, i32
  }
}

</mosaic_0001>

<llo_original>
// kernel: tpu_custom_call.1
$region0: #{tpu_custom_call.1}
  #allocation0 [shape = 'u32[]', space=smem, size = 0x4, offset = 0x4, fixed_abs, tag = 'smem constant byte address 0x4 - core index']
  #allocation1 [shape = 'u32[144,128]{1,0:T(1,128)}', space=vmem, size = 0x12000, scoped, tag = 'internal scratch']
  #allocation2 [shape = 'f32[256,128]{1,0:T(8,128)}', space=vmem, size = 0x20000, scoped, tag = 'scratch operand']
  %s0 = inlined_call_operand.vmem [shape: bf16[512,36], index: 0, kind: input, shape index: {}]
  %s1 = inlined_call_operand.vmem [shape: bf16[36,128], index: 1, kind: input, shape index: {}]
  %s2 = inlined_call_operand.vmem [shape: f32[1,128], index: 2, kind: input, shape index: {}]
  %s3 = inlined_call_operand.hbm [shape: bf16[512,128], index: 3, kind: output, shape index: {}]
  %s4 = sld [smem:[#allocation0]]
  $region53: #{tpu_custom_call.1} parent=0
    _
  %s6 = ssub.s32 1, %s4
  %s7 = scalar_select 0, %s6, %s4
  $region1: #{tpu_custom_call.1} parent=0
    #allocation3 [shape = 'u8[131072]{0}', space=vmem, size = 0x20000, scoped, tag = 'output window, operand 0']
    #allocation4 [shape = 's32[2]{0}', space=sflag, size = 0x8, scoped, tag = 'scoped memory for tpu_custom_call.1']
    %8 = vsyncpa [#allocation4], 0
    %s9 = scalar_lea.sflag [#allocation4], 1
    %10 = vsyncpa %s9, 0
    loop: start=0, step=1, limit=4
    $region2: #{tpu_custom_call.1} parent=1 // loop_pre_header
      _
    $region3: #{tpu_custom_call.1} parent=1 // loop_header
      %s12 = sphi 0, %s16
      %p13 = scmp.ge.s32.totalorder %s12, 4
      %s19 = sphi 0, %s38
      %s20 = sphi 0, %s34
      %s21 = sphi 0, %s30
      %s22 = sphi 0, %s19
      %s23 = sphi 0, %s20
      %s24 = sphi 0, %s21
      %s25 = sphi 0, %s22
      %s26 = sphi 0, %s23
      %s27 = sphi 0, %s24
      %s43 = sphi 0, %s45
      %s46 = sphi 0, %s43
      %s47 = sphi 0, %s46
      %s63 = sphi 0, %s47
      %s71 = sphi 0, %s73
      %s74 = sphi 0, %s71
      %s75 = sphi 0, %s74
      %s91 = sphi 0, %s75
      %s97 = sphi 0, %s99
      %s100 = sphi 0, %s97
      %s101 = sphi 0, %s100
      %s117 = sphi 0, %s101
      %s125 = sphi 0, %s127
      %s128 = sphi 0, %s125
      %s129 = sphi 0, %s128
      %s145 = sphi 0, %s129
    $region4: #{tpu_custom_call.1} parent=1 // loop_header_branch
      %15 = sbr.rel (%p13) target = $region8
    $region5: #{tpu_custom_call.1} parent=1 // loop_body
      %s17 = ssub.s32 %s12, 1
      %s18 = ssub.s32 %s12, 2
      %s28 = sadd.s32 1, %s21
      %p29 = scmp.ge.s32.totalorder %s28, 1
      %s30 = scalar_select %p29, 0, %s28
      %s31 = sadd.s32 1, %s20
      %s32 = scalar_select %p29, %s31, %s20
      %p33 = scmp.ge.s32.totalorder %s32, 1
      %s34 = scalar_select %p33, 0, %s32
      %s35 = sadd.s32 1, %s19
      %s36 = scalar_select %p33, %s35, %s19
      %p37 = scmp.ge.s32.totalorder %s36, 2
      %s38 = scalar_select %p37, 0, %s36
      %s39 = ssub.s32 %s19, %s38
      %s40 = ssub.s32 %s21, %s30
      %s41 = sor.u32 %s39, %s40
      %p42 = scmp.eq.s32.totalorder %s41, 0
      %s44 = sadd.s32 %s43, 1
      %s45 = scalar_select %p42, %s43, %s44
      %p48 = pneg %p42
      %p49 = scmp.eq.s32.totalorder %s12, 1
      %p50 = por %p48, %p49
      %p51 = scmp.ne.s32.totalorder %s43, %s46
      %p52 = scmp.eq.s32.totalorder %s12, 0
      %p53 = por %p51, %p52
      %p54 = scmp.ne.s32.totalorder %s43, %s46
      %p55 = scmp.eq.s32.totalorder %s17, 1
      %p56 = por %p54, %p55
      %p57 = scmp.ne.s32.totalorder %s46, %s47
      %p58 = scmp.eq.s32.totalorder %s17, 0
      %p59 = por %p57, %p58
      %p60 = scmp.ne.s32.totalorder %s46, %s47
      %p61 = scmp.eq.s32.totalorder %s18, 1
      %p62 = por %p60, %p61
      %p64 = scmp.ne.s32.totalorder %s47, %s63
      %p65 = scmp.eq.s32.totalorder %s18, 0
      %p66 = por %p64, %p65
      %s67 = ssub.s32 %s21, %s30
      %s68 = ssub.s32 %s20, %s34
      %s69 = sor.u32 %s67, %s68
      %p70 = scmp.eq.s32.totalorder %s69, 0
      %s72 = sadd.s32 %s71, 1
      %s73 = scalar_select %p70, %s71, %s72
      %p76 = pneg %p70
      %p77 = scmp.eq.s32.totalorder %s12, 1
      %p78 = por %p76, %p77
      %p79 = scmp.ne.s32.totalorder %s71, %s74
      %p80 = scmp.eq.s32.totalorder %s12, 0
      %p81 = por %p79, %p80
      %p82 = scmp.ne.s32.totalorder %s71, %s74
      %p83 = scmp.eq.s32.totalorder %s17, 1
      %p84 = por %p82, %p83
      %p85 = scmp.ne.s32.totalorder %s74, %s75
      %p86 = scmp.eq.s32.totalorder %s17, 0
      %p87 = por %p85, %p86
      %p88 = scmp.ne.s32.totalorder %s74, %s75
      %p89 = scmp.eq.s32.totalorder %s18, 1
      %p90 = por %p88, %p89
      %p92 = scmp.ne.s32.totalorder %s75, %s91
      %p93 = scmp.eq.s32.totalorder %s18, 0
      %p94 = por %p92, %p93
      %s95 = ssub.s32 %s20, %s34
      %p96 = scmp.eq.s32.totalorder %s95, 0
      %s98 = sadd.s32 %s97, 1
      %s99 = scalar_select %p96, %s97, %s98
      %p102 = pneg %p96
      %p103 = scmp.eq.s32.totalorder %s12, 1
      %p104 = por %p102, %p103
      %p105 = scmp.ne.s32.totalorder %s97, %s100
      %p106 = scmp.eq.s32.totalorder %s12, 0
      %p107 = por %p105, %p106
      %p108 = scmp.ne.s32.totalorder %s97, %s100
      %p109 = scmp.eq.s32.totalorder %s17, 1
      %p110 = por %p108, %p109
      %p111 = scmp.ne.s32.totalorder %s100, %s101
      %p112 = scmp.eq.s32.totalorder %s17, 0
      %p113 = por %p111, %p112
      %p114 = scmp.ne.s32.totalorder %s100, %s101
      %p115 = scmp.eq.s32.totalorder %s18, 1
      %p116 = por %p114, %p115
      %p118 = scmp.ne.s32.totalorder %s101, %s117
      %p119 = scmp.eq.s32.totalorder %s18, 0
      %p120 = por %p118, %p119
      %s121 = ssub.s32 %s19, %s38
      %s122 = ssub.s32 %s20, %s34
      %s123 = sor.u32 %s121, %s122
      %p124 = scmp.eq.s32.totalorder %s123, 0
      %s126 = sadd.s32 %s125, 1
      %s127 = scalar_select %p124, %s125, %s126
      %p130 = pneg %p124
      %p131 = scmp.eq.s32.totalorder %s12, 1
      %p132 = por %p130, %p131
      %p133 = scmp.ne.s32.totalorder %s125, %s128
      %p134 = scmp.eq.s32.totalorder %s12, 0
      %p135 = por %p133, %p134
      %p136 = scmp.ne.s32.totalorder %s125, %s128
      %p137 = scmp.eq.s32.totalorder %s17, 1
      %p138 = por %p136, %p137
      %p139 = scmp.ne.s32.totalorder %s128, %s129
      %p140 = scmp.eq.s32.totalorder %s17, 0
      %p141 = por %p139, %p140
      %p142 = scmp.ne.s32.totalorder %s128, %s129
      %p143 = scmp.eq.s32.totalorder %s18, 1
      %p144 = por %p142, %p143
      %p146 = scmp.ne.s32.totalorder %s129, %s145
      %p147 = scmp.eq.s32.totalorder %s18, 0
      %p148 = por %p146, %p147
      %p149 = scmp.le.s32.totalorder 1, %s12
      %p150 = scmp.lt.s32.totalorder %s12, 3
      %p151 = pnand %p149, %p150
      %p152 = pneg %p151
      // Predicated region
      $region9: #{tpu_custom_call.1} parent=5 // pred_check
        _
      $region10: #{tpu_custom_call.1} parent=5 // pred_check_branch
        %154 = sbr.rel (%p151) target = $region12
      $region11: #{tpu_custom_call.1} parent=5 // pred_region
        %s155 = ssub.s32 %s12, 1
        // Predicated region
        $region13: #{tpu_custom_call.1} parent=11 // pred_check
          %p156 = pneg %p87
        $region14: #{tpu_custom_call.1} parent=11 // pred_check_branch
          %158 = sbr.rel (%p156) target = $region16
        $region15: #{tpu_custom_call.1} parent=11 // pred_region
          %s159 = smul.u32 5, %s24
          %p160 = scmp.lt.s32.totalorder %s159, 4
          %s161 = scalar_select %p160, %s159, 4
          %p162 = scmp.lt.s32.totalorder %s23, 0
          %s163 = scalar_select %p162, %s23, 0
          %s164 = sadd.s32 %s163, %s161
          %s165 = smul.addr %s164, 4
          %s166 = scalar_lea.vmem %s1, %s165
          %s167 = smul.u32 5, %s24
        $region16: #{tpu_custom_call.1} parent=11 // pred_fallthru
          _
        // Predicated region
        $region17: #{tpu_custom_call.1} parent=11 // pred_check
          %p168 = pneg %p113
        $region18: #{tpu_custom_call.1} parent=11 // pred_check_branch
          %170 = sbr.rel (%p168) target = $region20
        $region19: #{tpu_custom_call.1} parent=11 // pred_region
          %p171 = scmp.lt.s32.totalorder %s23, 0
          %s172 = scalar_select %p171, %s23, 0
          %s173 = scalar_lea.vmem %s2, %s172
        $region20: #{tpu_custom_call.1} parent=11 // pred_fallthru
          _
      $region12: #{tpu_custom_call.1} parent=5 // pred_fallthru
        _
      %p174 = scmp.lt.s32.totalorder %s12, 2
      // Predicated region
      $region21: #{tpu_custom_call.1} parent=5 // pred_check
        %p175 = pneg %p174
      $region22: #{tpu_custom_call.1} parent=5 // pred_check_branch
        %177 = sbr.rel (%p175) target = $region24
      $region23: #{tpu_custom_call.1} parent=5 // pred_region
        // Predicated region
        $region25: #{tpu_custom_call.1} parent=23 // pred_check
          %p178 = pneg %p53
        $region26: #{tpu_custom_call.1} parent=23 // pred_check_branch
          %180 = sbr.rel (%p178) target = $region28
        $region27: #{tpu_custom_call.1} parent=23 // pred_region
          %s181 = smul.u32 32, %s19
          %p182 = scmp.lt.s32.totalorder %s181, 63
          %s183 = scalar_select %p182, %s181, 63
          %p184 = scmp.lt.s32.totalorder %s21, 0
          %s185 = scalar_select %p184, %s21, 0
          %s186 = sadd.s32 %s185, %s183
          %s187 = smul.addr %s186, 4
          %s188 = scalar_lea.vmem %s0, %s187
          %s189 = smul.u32 32, %s19
        $region28: #{tpu_custom_call.1} parent=23 // pred_fallthru
          _
      $region24: #{tpu_custom_call.1} parent=5 // pred_fallthru
        _
      %p190 = scmp.le.s32.totalorder 1, %s12
      %p191 = scmp.lt.s32.totalorder %s12, 3
      %p192 = pnand %p190, %p191
      %p193 = pneg %p192
      // Predicated region
      $region29: #{tpu_custom_call.1} parent=5 // pred_check
        _
      $region30: #{tpu_custom_call.1} parent=5 // pred_check_branch
        %195 = sbr.rel (%p192) target = $region32
      $region31: #{tpu_custom_call.1} parent=5 // pred_region
        %s196 = ssub.s32 %s12, 1
        %s197 = smul.u32 32, %s22
        %p198 = scmp.lt.s32.totalorder %s197, 63
        %s199 = scalar_select %p198, %s197, 63
        %p200 = scmp.lt.s32.totalorder %s24, 0
        %s201 = scalar_select %p200, %s24, 0
        %s202 = sadd.s32 %s201, %s199
        %s203 = smul.addr %s202, 4
        %s204 = scalar_lea.vmem %s0, %s203
        %p205 = pneg %p59
        %p206 = pneg %p56
        %s207 = smul.u32 5, %s24
        %p208 = scmp.lt.s32.totalorder %s207, 4
        %s209 = scalar_select %p208, %s207, 4
        %p210 = scmp.lt.s32.totalorder %s23, 0
        %s211 = scalar_select %p210, %s23, 0
        %s212 = sadd.s32 %s211, %s209
        %s213 = smul.addr %s212, 4
        %s214 = scalar_lea.vmem %s1, %s213
        %p215 = pneg %p87
        %p216 = pneg %p84
        %p217 = scmp.lt.s32.totalorder %s23, 0
        %s218 = scalar_select %p217, %s23, 0
        %s219 = scalar_lea.vmem %s2, %s218
        %p220 = pneg %p113
        %p221 = pneg %p110
        %p222 = pneg %p141
        %p223 = pneg %p138
        %s224 = sand.u32 %s128, 1
        %s225 = scalar_lea.sflag [#allocation4], %s224
        %s226 = sand.u32 %s128, 1
        %s227 = smul.addr %s226, 128
        %s228 = scalar_lea.vmem [#allocation3], %s227
        %s229 = smul.u32 32, %s22
        %p230 = scmp.lt.s32.totalorder %s229, 63
        %s231 = scalar_select %p230, %s229, 63
        %p232 = scmp.lt.s32.totalorder %s24, 0
        %s233 = scalar_select %p232, %s24, 0
        %s234 = sadd.s32 %s233, %s231
        %s235 = smul.addr %s234, 4
        %s236 = scalar_lea.vmem %s0, %s235
        %s237 = smul.u32 32, %s22
        %s238 = smul.u32 5, %s24
        %p239 = scmp.lt.s32.totalorder %s238, 4
        %s240 = scalar_select %p239, %s238, 4
        %p241 = scmp.lt.s32.totalorder %s23, 0
        %s242 = scalar_select %p241, %s23, 0
        %s243 = sadd.s32 %s242, %s240
        %s244 = smul.addr %s243, 4
        %s245 = scalar_lea.vmem %s1, %s244
        %s246 = smul.u32 5, %s24
        %p247 = scmp.lt.s32.totalorder %s23, 0
        %s248 = scalar_select %p247, %s23, 0
        %s249 = scalar_lea.vmem %s2, %s248
        %s250 = smul.u32 32, %s22
        %p252 = scmp.eq.s32.totalorder %s24, 0
        // Predicated region
        $region33: #{tpu_custom_call.1} parent=31 // pred_check
          %p253 = pneg %p252
        $region34: #{tpu_custom_call.1} parent=31 // pred_check_branch
          %255 = sbr.rel (%p253) target = $region36
        $region35: #{tpu_custom_call.1} parent=31 // pred_region
          %256 = vst [vmem:[#allocation2] sm:$0xff] 0.0
          %257 = vst [vmem:[#allocation2 + $0x8] sm:$0xff] 0.0
          %258 = vst [vmem:[#allocation2 + $0x10] sm:$0xff] 0.0
          %259 = vst [vmem:[#allocation2 + $0x18] sm:$0xff] 0.0
          %260 = vst [vmem:[#allocation2 + $0x20] sm:$0xff] 0.0
          %261 = vst [vmem:[#allocation2 + $0x28] sm:$0xff] 0.0
          %262 = vst [vmem:[#allocation2 + $0x30] sm:$0xff] 0.0
          %263 = vst [vmem:[#allocation2 + $0x38] sm:$0xff] 0.0
          %264 = vst [vmem:[#allocation2 + $0x40] sm:$0xff] 0.0
          %265 = vst [vmem:[#allocation2 + $0x48] sm:$0xff] 0.0
          %266 = vst [vmem:[#allocation2 + $0x50] sm:$0xff] 0.0
          %267 = vst [vmem:[#allocation2 + $0x58] sm:$0xff] 0.0
          %268 = vst [vmem:[#allocation2 + $0x60] sm:$0xff] 0.0
          %269 = vst [vmem:[#allocation2 + $0x68] sm:$0xff] 0.0
          %270 = vst [vmem:[#allocation2 + $0x70] sm:$0xff] 0.0
          %271 = vst [vmem:[#allocation2 + $0x78] sm:$0xff] 0.0
          %272 = vst [vmem:[#allocation2 + $0x80] sm:$0xff] 0.0
          %273 = vst [vmem:[#allocation2 + $0x88] sm:$0xff] 0.0
          %274 = vst [vmem:[#allocation2 + $0x90] sm:$0xff] 0.0
          %275 = vst [vmem:[#allocation2 + $0x98] sm:$0xff] 0.0
          %276 = vst [vmem:[#allocation2 + $0xa0] sm:$0xff] 0.0
          %277 = vst [vmem:[#allocation2 + $0xa8] sm:$0xff] 0.0
          %278 = vst [vmem:[#allocation2 + $0xb0] sm:$0xff] 0.0
          %279 = vst [vmem:[#allocation2 + $0xb8] sm:$0xff] 0.0
          %280 = vst [vmem:[#allocation2 + $0xc0] sm:$0xff] 0.0
          %281 = vst [vmem:[#allocation2 + $0xc8] sm:$0xff] 0.0
          %282 = vst [vmem:[#allocation2 + $0xd0] sm:$0xff] 0.0
          %283 = vst [vmem:[#allocation2 + $0xd8] sm:$0xff] 0.0
          %284 = vst [vmem:[#allocation2 + $0xe0] sm:$0xff] 0.0
          %285 = vst [vmem:[#allocation2 + $0xe8] sm:$0xff] 0.0
          %286 = vst [vmem:[#allocation2 + $0xf0] sm:$0xff] 0.0
          %287 = vst [vmem:[#allocation2 + $0xf8] sm:$0xff] 0.0
        $region36: #{tpu_custom_call.1} parent=31 // pred_fallthru
          _
        %v288 = vld [vmem:[#allocation2] sm:$0xff]
        %v289 = vld [vmem:[#allocation2 + $0x8] sm:$0xff]
        %v290 = vld [vmem:[#allocation2 + $0x10] sm:$0xff]
        %v291 = vld [vmem:[#allocation2 + $0x18] sm:$0xff]
        %v292 = vld [vmem:[#allocation2 + $0x20] sm:$0xff]
        %v293 = vld [vmem:[#allocation2 + $0x28] sm:$0xff]
        %v294 = vld [vmem:[#allocation2 + $0x30] sm:$0xff]
        %v295 = vld [vmem:[#allocation2 + $0x38] sm:$0xff]
        %v296 = vld [vmem:[#allocation2 + $0x40] sm:$0xff]
        %v297 = vld [vmem:[#allocation2 + $0x48] sm:$0xff]
        %v298 = vld [vmem:[#allocation2 + $0x50] sm:$0xff]
        %v299 = vld [vmem:[#allocation2 + $0x58] sm:$0xff]
        %v300 = vld [vmem:[#allocation2 + $0x60] sm:$0xff]
        %v301 = vld [vmem:[#allocation2 + $0x68] sm:$0xff]
        %v302 = vld [vmem:[#allocation2 + $0x70] sm:$0xff]
        %v303 = vld [vmem:[#allocation2 + $0x78] sm:$0xff]
        %v304 = vld [vmem:[#allocation2 + $0x80] sm:$0xff]
        %v305 = vld [vmem:[#allocation2 + $0x88] sm:$0xff]
        %v306 = vld [vmem:[#allocation2 + $0x90] sm:$0xff]
        %v307 = vld [vmem:[#allocation2 + $0x98] sm:$0xff]
        %v308 = vld [vmem:[#allocation2 + $0xa0] sm:$0xff]
        %v309 = vld [vmem:[#allocation2 + $0xa8] sm:$0xff]
        %v310 = vld [vmem:[#allocation2 + $0xb0] sm:$0xff]
        %v311 = vld [vmem:[#allocation2 + $0xb8] sm:$0xff]
        %v312 = vld [vmem:[#allocation2 + $0xc0] sm:$0xff]
        %v313 = vld [vmem:[#allocation2 + $0xc8] sm:$0xff]
        %v314 = vld [vmem:[#allocation2 + $0xd0] sm:$0xff]
        %v315 = vld [vmem:[#allocation2 + $0xd8] sm:$0xff]
        %v316 = vld [vmem:[#allocation2 + $0xe0] sm:$0xff]
        %v317 = vld [vmem:[#allocation2 + $0xe8] sm:$0xff]
        %v318 = vld [vmem:[#allocation2 + $0xf0] sm:$0xff]
        %v319 = vld [vmem:[#allocation2 + $0xf8] sm:$0xff]
        %v320 = vld [vmem:[%s236] sm:$0xf]
        %v321 = vld [vmem:[%s236 + $0x4] sm:$0xf]
        %v322 = vld [vmem:[%s236 + $0x8] sm:$0xf]
        %v323 = vld [vmem:[%s236 + $0xc] sm:$0xf]
        %v324 = vld [vmem:[%s236 + $0x10] sm:$0xf]
        %v325 = vld [vmem:[%s236 + $0x14] sm:$0xf]
        %v326 = vld [vmem:[%s236 + $0x18] sm:$0xf]
        %v327 = vld [vmem:[%s236 + $0x1c] sm:$0xf]
        %v328 = vld [vmem:[%s236 + $0x20] sm:$0xf]
        %v329 = vld [vmem:[%s236 + $0x24] sm:$0xf]
        %v330 = vld [vmem:[%s236 + $0x28] sm:$0xf]
        %v331 = vld [vmem:[%s236 + $0x2c] sm:$0xf]
        %v332 = vld [vmem:[%s236 + $0x30] sm:$0xf]
        %v333 = vld [vmem:[%s236 + $0x34] sm:$0xf]
        %v334 = vld [vmem:[%s236 + $0x38] sm:$0xf]
        %v335 = vld [vmem:[%s236 + $0x3c] sm:$0xf]
        %v336 = vld [vmem:[%s236 + $0x40] sm:$0xf]
        %v337 = vld [vmem:[%s236 + $0x44] sm:$0xf]
        %v338 = vld [vmem:[%s236 + $0x48] sm:$0xf]
        %v339 = vld [vmem:[%s236 + $0x4c] sm:$0xf]
        %v340 = vld [vmem:[%s236 + $0x50] sm:$0xf]
        %v341 = vld [vmem:[%s236 + $0x54] sm:$0xf]
        %v342 = vld [vmem:[%s236 + $0x58] sm:$0xf]
        %v343 = vld [vmem:[%s236 + $0x5c] sm:$0xf]
        %v344 = vld [vmem:[%s236 + $0x60] sm:$0xf]
        %v345 = vld [vmem:[%s236 + $0x64] sm:$0xf]
        %v346 = vld [vmem:[%s236 + $0x68] sm:$0xf]
        %v347 = vld [vmem:[%s236 + $0x6c] sm:$0xf]
        %v348 = vld [vmem:[%s236 + $0x70] sm:$0xf]
        %v349 = vld [vmem:[%s236 + $0x74] sm:$0xf]
        %v350 = vld [vmem:[%s236 + $0x78] sm:$0xf]
        %v351 = vld [vmem:[%s236 + $0x7c] sm:$0xf]
        %v352 = vld [vmem:[%s245] sm:$0xf]
        %v353 = vld [vmem:[%s245 + $0x4] sm:$0xf]
        %v354 = vld [vmem:[%s245 + $0x8] sm:$0xf]
        %v355 = vld [vmem:[%s245 + $0xc] sm:$0xf]
        %v356 = vld [vmem:[%s245 + $0x10] sm:$0x3]
        %v389 = vunpack.c.l.b16 %v320
        %v390 = vunpack.c.l.b16 %v321
        %v391 = vunpack.c.l.b16 %v322
        %v392 = vunpack.c.l.b16 %v323
        %v393 = vunpack.c.l.b16 %v324
        %v394 = vunpack.c.l.b16 %v325
        %v395 = vunpack.c.l.b16 %v326
        %v396 = vunpack.c.l.b16 %v327
        %v397 = vunpack.c.l.b16 %v328
        %v398 = vunpack.c.l.b16 %v329
        %v399 = vunpack.c.l.b16 %v330
        %v400 = vunpack.c.l.b16 %v331
        %v401 = vunpack.c.l.b16 %v332
        %v402 = vunpack.c.l.b16 %v333
        %v403 = vunpack.c.l.b16 %v334
        %v404 = vunpack.c.l.b16 %v335
        %v405 = vunpack.c.l.b16 %v336
        %v406 = vunpack.c.l.b16 %v337
        %v407 = vunpack.c.l.b16 %v338
        %v408 = vunpack.c.l.b16 %v339
        %v409 = vunpack.c.l.b16 %v340
        %v410 = vunpack.c.l.b16 %v341
        %v411 = vunpack.c.l.b16 %v342
        %v412 = vunpack.c.l.b16 %v343
        %v413 = vunpack.c.l.b16 %v344
        %v414 = vunpack.c.l.b16 %v345
        %v415 = vunpack.c.l.b16 %v346
        %v416 = vunpack.c.l.b16 %v347
        %v417 = vunpack.c.l.b16 %v348
        %v418 = vunpack.c.l.b16 %v349
        %v419 = vunpack.c.l.b16 %v350
        %v420 = vunpack.c.l.b16 %v351
        %v421 = vpack.c.b16 %v390, %v389
        %v422 = vpack.c.b16 %v392, %v391
        %v423 = vpack.c.b16 %v394, %v393
        %v424 = vpack.c.b16 %v396, %v395
        %v425 = vpack.c.b16 %v398, %v397
        %v426 = vpack.c.b16 %v400, %v399
        %v427 = vpack.c.b16 %v402, %v401
        %v428 = vpack.c.b16 %v404, %v403
        %v429 = vpack.c.b16 %v406, %v405
        %v430 = vpack.c.b16 %v408, %v407
        %v431 = vpack.c.b16 %v410, %v409
        %v432 = vpack.c.b16 %v412, %v411
        %v433 = vpack.c.b16 %v414, %v413
        %v434 = vpack.c.b16 %v416, %v415
        %v435 = vpack.c.b16 %v418, %v417
        %v436 = vpack.c.b16 %v420, %v419
        %v442 = vunpack.c.l.b16 %v352
        %v443 = vunpack.c.l.b16 %v353
        %v444 = vunpack.c.l.b16 %v354
        %v445 = vunpack.c.l.b16 %v355
        %v446 = vunpack.c.l.b16 %v356
        %v447 = vpack.c.b16 %v443, %v442
        %v448 = vpack.c.b16 %v445, %v444
        %v449 = vpack.c.b16 %v446, %v446
        %vm452 = vcmask 293888
        %v454 = vsel %vm452, %v421, 0
        %v457 = vsel %vm452, %v422, 0
        %v460 = vsel %vm452, %v423, 0
        %v463 = vsel %vm452, %v424, 0
        %v466 = vsel %vm452, %v425, 0
        %v469 = vsel %vm452, %v426, 0
        %v472 = vsel %vm452, %v427, 0
        %v475 = vsel %vm452, %v428, 0
        %v478 = vsel %vm452, %v429, 0
        %v481 = vsel %vm452, %v430, 0
        %v484 = vsel %vm452, %v431, 0
        %v487 = vsel %vm452, %v432, 0
        %v490 = vsel %vm452, %v433, 0
        %v493 = vsel %vm452, %v434, 0
        %v496 = vsel %vm452, %v435, 0
        %v499 = vsel %vm452, %v436, 0
        %vm501 = vcmask 1041408
        %v503 = vsel %vm501, %v449, 0
        %505 = vmatprep.subr.bf16.mxu0 0
        %506 = vmatpush1.bf16.msra.mxu0 %v447
        %507 = vmatprep.subr.bf16.mxu0 0
        %508 = vmatpush1.bf16.msra.mxu0 %v448
        %509 = vmatprep.subr.bf16.mxu0 0
        %510 = vmatpush1.bf16.msra.mxu0 %v503
        %511 = vmatprep.subr.bf16.mxu0 0
        %512 = vmatpush1.bf16.msra.mxu0 0
        %513 = vmatprep.subr.bf16.mxu0 0
        %514 = vmatpush1.bf16.msra.mxu0 0
        %515 = vmatprep.subr.bf16.mxu0 0
        %516 = vmatpush1.bf16.msra.mxu0 0
        %517 = vmatprep.subr.bf16.mxu0 0
        %518 = vmatpush1.bf16.msra.mxu0 0
        %519 = vmatprep.subr.bf16.mxu0 0
        %520 = vmatpush1.bf16.msra.mxu0 0
        %521 = vmatprep.subr.bf16.mxu0 0
        %522 = vmatpush1.bf16.msra.mxu0 0
        %523 = vmatprep.subr.bf16.mxu0 0
        %524 = vmatpush1.bf16.msra.mxu0 0
        %525 = vmatprep.subr.bf16.mxu0 0
        %526 = vmatpush1.bf16.msra.mxu0 0
        %527 = vmatprep.subr.bf16.mxu0 0
        %528 = vmatpush1.bf16.msra.mxu0 0
        %529 = vmatprep.subr.bf16.mxu0 0
        %530 = vmatpush1.bf16.msra.mxu0 0
        %531 = vmatprep.subr.bf16.mxu0 0
        %532 = vmatpush1.bf16.msra.mxu0 0
        %533 = vmatprep.subr.bf16.mxu0 0
        %534 = vmatpush1.bf16.msra.mxu0 0
        %535 = vmatprep.subr.bf16.mxu0 0
        %536 = vmatpush1.bf16.msra.mxu0 0
        %537 = vmatprep.mubr.bf16.mxu0 0
        %538 = vmatmul.mubr.bf16.gmra.mrb[0].mxu0 %v454
        %v539 = vpop.f32.mrb[0].mxu0
        %v540 = vadd.f32 0.0, %v539
        %v541 = vpop.f32.mrb[0].mxu0
        %v542 = vpop.f32.mrb[0].mxu0
        %v543 = vadd.f32 0.0, %v542
        %v544 = vpop.f32.mrb[0].mxu0
        %545 = vmatprep.mubr.bf16.mxu0 0
        %546 = vmatmul.mubr.bf16.gmra.mrb[0].mxu0 %v457
        %v547 = vpop.f32.mrb[0].mxu0
        %v548 = vadd.f32 0.0, %v547
        %v549 = vpop.f32.mrb[0].mxu0
        %v550 = vpop.f32.mrb[0].mxu0
        %v551 = vadd.f32 0.0, %v550
        %v552 = vpop.f32.mrb[0].mxu0
        %553 = vmatprep.mubr.bf16.mxu0 0
        %554 = vmatmul.mubr.bf16.gmra.mrb[0].mxu0 %v460
        %v555 = vpop.f32.mrb[0].mxu0
        %v556 = vadd.f32 0.0, %v555
        %v557 = vpop.f32.mrb[0].mxu0
        %v558 = vpop.f32.mrb[0].mxu0
        %v559 = vadd.f32 0.0, %v558
        %v560 = vpop.f32.mrb[0].mxu0
        %561 = vmatprep.mubr.bf16.mxu0 0
        %562 = vmatmul.mubr.bf16.gmra.mrb[0].mxu0 %v463
        %v563 = vpop.f32.mrb[0].mxu0
        %v564 = vadd.f32 0.0, %v563
        %v565 = vpop.f32.mrb[0].mxu0
        %v566 = vpop.f32.mrb[0].mxu0
        %v567 = vadd.f32 0.0, %v566
        %v568 = vpop.f32.mrb[0].mxu0
        %569 = vmatprep.mubr.bf16.mxu0 0
        %570 = vmatmul.mubr.bf16.gmra.mrb[0].mxu0 %v466
        %v571 = vpop.f32.mrb[0].mxu0
        %v572 = vadd.f32 0.0, %v571
        %v573 = vpop.f32.mrb[0].mxu0
        %v574 = vpop.f32.mrb[0].mxu0
        %v575 = vadd.f32 0.0, %v574
        %v576 = vpop.f32.mrb[0].mxu0
        %577 = vmatprep.mubr.bf16.mxu0 0
        %578 = vmatmul.mubr.bf16.gmra.mrb[0].mxu0 %v469
        %v579 = vpop.f32.mrb[0].mxu0
        %v580 = vadd.f32 0.0, %v579
        %v581 = vpop.f32.mrb[0].mxu0
        %v582 = vpop.f32.mrb[0].mxu0
        %v583 = vadd.f32 0.0, %v582
        %v584 = vpop.f32.mrb[0].mxu0
        %585 = vmatprep.mubr.bf16.mxu0 0
        %586 = vmatmul.mubr.bf16.gmra.mrb[0].mxu0 %v472
        %v587 = vpop.f32.mrb[0].mxu0
        %v588 = vadd.f32 0.0, %v587
        %v589 = vpop.f32.mrb[0].mxu0
        %v590 = vpop.f32.mrb[0].mxu0
        %v591 = vadd.f32 0.0, %v590
        %v592 = vpop.f32.mrb[0].mxu0
        %593 = vmatprep.mubr.bf16.mxu0 0
        %594 = vmatmul.mubr.bf16.gmra.mrb[0].mxu0 %v475
        %v595 = vpop.f32.mrb[0].mxu0
        %v596 = vadd.f32 0.0, %v595
        %v597 = vpop.f32.mrb[0].mxu0
        %v598 = vpop.f32.mrb[0].mxu0
        %v599 = vadd.f32 0.0, %v598
        %v600 = vpop.f32.mrb[0].mxu0
        %601 = vmatprep.mubr.bf16.mxu0 0
        %602 = vmatmul.mubr.bf16.gmra.mrb[0].mxu0 %v478
        %v603 = vpop.f32.mrb[0].mxu0
        %v604 = vadd.f32 0.0, %v603
        %v605 = vpop.f32.mrb[0].mxu0
        %v606 = vpop.f32.mrb[0].mxu0
        %v607 = vadd.f32 0.0, %v606
        %v608 = vpop.f32.mrb[0].mxu0
        %609 = vmatprep.mubr.bf16.mxu0 0
        %610 = vmatmul.mubr.bf16.gmra.mrb[0].mxu0 %v481
        %v611 = vpop.f32.mrb[0].mxu0
        %v612 = vadd.f32 0.0, %v611
        %v613 = vpop.f32.mrb[0].mxu0
        %v614 = vpop.f32.mrb[0].mxu0
        %v615 = vadd.f32 0.0, %v614
        %v616 = vpop.f32.mrb[0].mxu0
        %617 = vmatprep.mubr.bf16.mxu0 0
        %618 = vmatmul.mubr.bf16.gmra.mrb[0].mxu0 %v484
        %v619 = vpop.f32.mrb[0].mxu0
        %v620 = vadd.f32 0.0, %v619
        %v621 = vpop.f32.mrb[0].mxu0
        %v622 = vpop.f32.mrb[0].mxu0
        %v623 = vadd.f32 0.0, %v622
        %v624 = vpop.f32.mrb[0].mxu0
        %625 = vmatprep.mubr.bf16.mxu0 0
        %626 = vmatmul.mubr.bf16.gmra.mrb[0].mxu0 %v487
        %v627 = vpop.f32.mrb[0].mxu0
        %v628 = vadd.f32 0.0, %v627
        %v629 = vpop.f32.mrb[0].mxu0
        %v630 = vpop.f32.mrb[0].mxu0
        %v631 = vadd.f32 0.0, %v630
        %v632 = vpop.f32.mrb[0].mxu0
        %633 = vmatprep.mubr.bf16.mxu0 0
        %634 = vmatmul.mubr.bf16.gmra.mrb[0].mxu0 %v490
        %v635 = vpop.f32.mrb[0].mxu0
        %v636 = vadd.f32 0.0, %v635
        %v637 = vpop.f32.mrb[0].mxu0
        %v638 = vpop.f32.mrb[0].mxu0
        %v639 = vadd.f32 0.0, %v638
        %v640 = vpop.f32.mrb[0].mxu0
        %641 = vmatprep.mubr.bf16.mxu0 0
        %642 = vmatmul.mubr.bf16.gmra.mrb[0].mxu0 %v493
        %v643 = vpop.f32.mrb[0].mxu0
        %v644 = vadd.f32 0.0, %v643
        %v645 = vpop.f32.mrb[0].mxu0
        %v646 = vpop.f32.mrb[0].mxu0
        %v647 = vadd.f32 0.0, %v646
        %v648 = vpop.f32.mrb[0].mxu0
        %649 = vmatprep.mubr.bf16.mxu0 0
        %650 = vmatmul.mubr.bf16.gmra.mrb[0].mxu0 %v496
        %v651 = vpop.f32.mrb[0].mxu0
        %v652 = vadd.f32 0.0, %v651
        %v653 = vpop.f32.mrb[0].mxu0
        %v654 = vpop.f32.mrb[0].mxu0
        %v655 = vadd.f32 0.0, %v654
        %v656 = vpop.f32.mrb[0].mxu0
        %657 = vmatprep.mubr.bf16.mxu0 0
        %658 = vmatmul.mubr.bf16.gmra.mrb[0].mxu0 %v499
        %v659 = vpop.f32.mrb[0].mxu0
        %v660 = vadd.f32 0.0, %v659
        %v661 = vpop.f32.mrb[0].mxu0
        %v662 = vpop.f32.mrb[0].mxu0
        %v663 = vadd.f32 0.0, %v662
        %v664 = vpop.f32.mrb[0].mxu0
        %665 = vdwg.mxu0
        %v666 = vadd.f32 %v288, %v540
        %v667 = vadd.f32 %v289, %v543
        %v668 = vadd.f32 %v290, %v548
        %v669 = vadd.f32 %v291, %v551
        %v670 = vadd.f32 %v292, %v556
        %v671 = vadd.f32 %v293, %v559
        %v672 = vadd.f32 %v294, %v564
        %v673 = vadd.f32 %v295, %v567
        %v674 = vadd.f32 %v296, %v572
        %v675 = vadd.f32 %v297, %v575
        %v676 = vadd.f32 %v298, %v580
        %v677 = vadd.f32 %v299, %v583
        %v678 = vadd.f32 %v300, %v588
        %v679 = vadd.f32 %v301, %v591
        %v680 = vadd.f32 %v302, %v596
        %v681 = vadd.f32 %v303, %v599
        %v682 = vadd.f32 %v304, %v604
        %v683 = vadd.f32 %v305, %v607
        %v684 = vadd.f32 %v306, %v612
        %v685 = vadd.f32 %v307, %v615
        %v686 = vadd.f32 %v308, %v620
        %v687 = vadd.f32 %v309, %v623
        %v688 = vadd.f32 %v310, %v628
        %v689 = vadd.f32 %v311, %v631
        %v690 = vadd.f32 %v312, %v636
        %v691 = vadd.f32 %v313, %v639
        %v692 = vadd.f32 %v314, %v644
        %v693 = vadd.f32 %v315, %v647
        %v694 = vadd.f32 %v316, %v652
        %v695 = vadd.f32 %v317, %v655
        %v696 = vadd.f32 %v318, %v660
        %v697 = vadd.f32 %v319, %v663
        %698 = vst [vmem:[#allocation2] sm:$0xff] %v666
        %699 = vst [vmem:[#allocation2 + $0x8] sm:$0xff] %v667
        %700 = vst [vmem:[#allocation2 + $0x10] sm:$0xff] %v668
        %701 = vst [vmem:[#allocation2 + $0x18] sm:$0xff] %v669
        %702 = vst [vmem:[#allocation2 + $0x20] sm:$0xff] %v670
        %703 = vst [vmem:[#allocation2 + $0x28] sm:$0xff] %v671
        %704 = vst [vmem:[#allocation2 + $0x30] sm:$0xff] %v672
        %705 = vst [vmem:[#allocation2 + $0x38] sm:$0xff] %v673
        %706 = vst [vmem:[#allocation2 + $0x40] sm:$0xff] %v674
        %707 = vst [vmem:[#allocation2 + $0x48] sm:$0xff] %v675
        %708 = vst [vmem:[#allocation2 + $0x50] sm:$0xff] %v676
        %709 = vst [vmem:[#allocation2 + $0x58] sm:$0xff] %v677
        %710 = vst [vmem:[#allocation2 + $0x60] sm:$0xff] %v678
        %711 = vst [vmem:[#allocation2 + $0x68] sm:$0xff] %v679
        %712 = vst [vmem:[#allocation2 + $0x70] sm:$0xff] %v680
        %713 = vst [vmem:[#allocation2 + $0x78] sm:$0xff] %v681
        %714 = vst [vmem:[#allocation2 + $0x80] sm:$0xff] %v682
        %715 = vst [vmem:[#allocation2 + $0x88] sm:$0xff] %v683
        %716 = vst [vmem:[#allocation2 + $0x90] sm:$0xff] %v684
        %717 = vst [vmem:[#allocation2 + $0x98] sm:$0xff] %v685
        %718 = vst [vmem:[#allocation2 + $0xa0] sm:$0xff] %v686
        %719 = vst [vmem:[#allocation2 + $0xa8] sm:$0xff] %v687
        %720 = vst [vmem:[#allocation2 + $0xb0] sm:$0xff] %v688
        %721 = vst [vmem:[#allocation2 + $0xb8] sm:$0xff] %v689
        %722 = vst [vmem:[#allocation2 + $0xc0] sm:$0xff] %v690
        %723 = vst [vmem:[#allocation2 + $0xc8] sm:$0xff] %v691
        %724 = vst [vmem:[#allocation2 + $0xd0] sm:$0xff] %v692
        %725 = vst [vmem:[#allocation2 + $0xd8] sm:$0xff] %v693
        %726 = vst [vmem:[#allocation2 + $0xe0] sm:$0xff] %v694
        %727 = vst [vmem:[#allocation2 + $0xe8] sm:$0xff] %v695
        %728 = vst [vmem:[#allocation2 + $0xf0] sm:$0xff] %v696
        %729 = vst [vmem:[#allocation2 + $0xf8] sm:$0xff] %v697
        // Predicated region
        $region37: #{tpu_custom_call.1} parent=31 // pred_check
          %p730 = pneg %p252
        $region38: #{tpu_custom_call.1} parent=31 // pred_check_branch
          %732 = sbr.rel (%p730) target = $region40
        $region39: #{tpu_custom_call.1} parent=31 // pred_region
          %v733 = vld [vmem:[#allocation2] sm:$0xff]
          %v734 = vld [vmem:[#allocation2 + $0x8] sm:$0xff]
          %v735 = vld [vmem:[#allocation2 + $0x10] sm:$0xff]
          %v736 = vld [vmem:[#allocation2 + $0x18] sm:$0xff]
          %v737 = vld [vmem:[#allocation2 + $0x20] sm:$0xff]
          %v738 = vld [vmem:[#allocation2 + $0x28] sm:$0xff]
          %v739 = vld [vmem:[#allocation2 + $0x30] sm:$0xff]
          %v740 = vld [vmem:[#allocation2 + $0x38] sm:$0xff]
          %v741 = vld [vmem:[#allocation2 + $0x40] sm:$0xff]
          %v742 = vld [vmem:[#allocation2 + $0x48] sm:$0xff]
          %v743 = vld [vmem:[#allocation2 + $0x50] sm:$0xff]
          %v744 = vld [vmem:[#allocation2 + $0x58] sm:$0xff]
          %v745 = vld [vmem:[#allocation2 + $0x60] sm:$0xff]
          %v746 = vld [vmem:[#allocation2 + $0x68] sm:$0xff]
          %v747 = vld [vmem:[#allocation2 + $0x70] sm:$0xff]
          %v748 = vld [vmem:[#allocation2 + $0x78] sm:$0xff]
          %v749 = vld [vmem:[#allocation2 + $0x80] sm:$0xff]
          %v750 = vld [vmem:[#allocation2 + $0x88] sm:$0xff]
          %v751 = vld [vmem:[#allocation2 + $0x90] sm:$0xff]
          %v752 = vld [vmem:[#allocation2 + $0x98] sm:$0xff]
          %v753 = vld [vmem:[#allocation2 + $0xa0] sm:$0xff]
          %v754 = vld [vmem:[#allocation2 + $0xa8] sm:$0xff]
          %v755 = vld [vmem:[#allocation2 + $0xb0] sm:$0xff]
          %v756 = vld [vmem:[#allocation2 + $0xb8] sm:$0xff]
          %v757 = vld [vmem:[#allocation2 + $0xc0] sm:$0xff]
          %v758 = vld [vmem:[#allocation2 + $0xc8] sm:$0xff]
          %v759 = vld [vmem:[#allocation2 + $0xd0] sm:$0xff]
          %v760 = vld [vmem:[#allocation2 + $0xd8] sm:$0xff]
          %v761 = vld [vmem:[#allocation2 + $0xe0] sm:$0xff]
          %v762 = vld [vmem:[#allocation2 + $0xe8] sm:$0xff]
          %v763 = vld [vmem:[#allocation2 + $0xf0] sm:$0xff]
          %v764 = vld [vmem:[#allocation2 + $0xf8] sm:$0xff]
          %v765 = vld [vmem:[%s249] sm:$0x1]
          %v767 = vlaneseq
          %v768 = vshrl.u32 %v767, 7
          %v769 = vsub.s32 0, %v768
          %v770 = vrot.slane %v765, %v769
          %v772 = vadd.f32 %v733, %v770
          %v773 = vadd.f32 %v734, %v770
          %v774 = vadd.f32 %v735, %v770
          %v775 = vadd.f32 %v736, %v770
          %v776 = vadd.f32 %v737, %v770
          %v777 = vadd.f32 %v738, %v770
          %v778 = vadd.f32 %v739, %v770
          %v779 = vadd.f32 %v740, %v770
          %v780 = vadd.f32 %v741, %v770
          %v781 = vadd.f32 %v742, %v770
          %v782 = vadd.f32 %v743, %v770
          %v783 = vadd.f32 %v744, %v770
          %v784 = vadd.f32 %v745, %v770
          %v785 = vadd.f32 %v746, %v770
          %v786 = vadd.f32 %v747, %v770
          %v787 = vadd.f32 %v748, %v770
          %v788 = vadd.f32 %v749, %v770
          %v789 = vadd.f32 %v750, %v770
          %v790 = vadd.f32 %v751, %v770
          %v791 = vadd.f32 %v752, %v770
          %v792 = vadd.f32 %v753, %v770
          %v793 = vadd.f32 %v754, %v770
          %v794 = vadd.f32 %v755, %v770
          %v795 = vadd.f32 %v756, %v770
          %v796 = vadd.f32 %v757, %v770
          %v797 = vadd.f32 %v758, %v770
          %v798 = vadd.f32 %v759, %v770
          %v799 = vadd.f32 %v760, %v770
          %v800 = vadd.f32 %v761, %v770
          %v801 = vadd.f32 %v762, %v770
          %v802 = vadd.f32 %v763, %v770
          %v803 = vadd.f32 %v764, %v770
          %v804 = vmul.f32 %v772, 0.1
          %v805 = vmul.f32 %v773, 0.1
          %v806 = vmul.f32 %v774, 0.1
          %v807 = vmul.f32 %v775, 0.1
          %v808 = vmul.f32 %v776, 0.1
          %v809 = vmul.f32 %v777, 0.1
          %v810 = vmul.f32 %v778, 0.1
          %v811 = vmul.f32 %v779, 0.1
          %v812 = vmul.f32 %v780, 0.1
          %v813 = vmul.f32 %v781, 0.1
          %v814 = vmul.f32 %v782, 0.1
          %v815 = vmul.f32 %v783, 0.1
          %v816 = vmul.f32 %v784, 0.1
          %v817 = vmul.f32 %v785, 0.1
          %v818 = vmul.f32 %v786, 0.1
          %v819 = vmul.f32 %v787, 0.1
          %v820 = vmul.f32 %v788, 0.1
          %v821 = vmul.f32 %v789, 0.1
          %v822 = vmul.f32 %v790, 0.1
          %v823 = vmul.f32 %v791, 0.1
          %v824 = vmul.f32 %v792, 0.1
          %v825 = vmul.f32 %v793, 0.1
          %v826 = vmul.f32 %v794, 0.1
          %v827 = vmul.f32 %v795, 0.1
          %v828 = vmul.f32 %v796, 0.1
          %v829 = vmul.f32 %v797, 0.1
          %v830 = vmul.f32 %v798, 0.1
          %v831 = vmul.f32 %v799, 0.1
          %v832 = vmul.f32 %v800, 0.1
          %v833 = vmul.f32 %v801, 0.1
          %v834 = vmul.f32 %v802, 0.1
          %v835 = vmul.f32 %v803, 0.1
          %v836 = vmax.f32 %v772, %v804
          %v837 = vmax.f32 %v773, %v805
          %v838 = vmax.f32 %v774, %v806
          %v839 = vmax.f32 %v775, %v807
          %v840 = vmax.f32 %v776, %v808
          %v841 = vmax.f32 %v777, %v809
          %v842 = vmax.f32 %v778, %v810
          %v843 = vmax.f32 %v779, %v811
          %v844 = vmax.f32 %v780, %v812
          %v845 = vmax.f32 %v781, %v813
          %v846 = vmax.f32 %v782, %v814
          %v847 = vmax.f32 %v783, %v815
          %v848 = vmax.f32 %v784, %v816
          %v849 = vmax.f32 %v785, %v817
          %v850 = vmax.f32 %v786, %v818
          %v851 = vmax.f32 %v787, %v819
          %v852 = vmax.f32 %v788, %v820
          %v853 = vmax.f32 %v789, %v821
          %v854 = vmax.f32 %v790, %v822
          %v855 = vmax.f32 %v791, %v823
          %v856 = vmax.f32 %v792, %v824
          %v857 = vmax.f32 %v793, %v825
          %v858 = vmax.f32 %v794, %v826
          %v859 = vmax.f32 %v795, %v827
          %v860 = vmax.f32 %v796, %v828
          %v861 = vmax.f32 %v797, %v829
          %v862 = vmax.f32 %v798, %v830
          %v863 = vmax.f32 %v799, %v831
          %v864 = vmax.f32 %v800, %v832
          %v865 = vmax.f32 %v801, %v833
          %v866 = vmax.f32 %v802, %v834
          %v867 = vmax.f32 %v803, %v835
          %v868 = vpack.c.bf16 %v837, %v836
          %v869 = vpack.c.bf16 %v839, %v838
          %v870 = vpack.c.bf16 %v841, %v840
          %v871 = vpack.c.bf16 %v843, %v842
          %v872 = vpack.c.bf16 %v845, %v844
          %v873 = vpack.c.bf16 %v847, %v846
          %v874 = vpack.c.bf16 %v849, %v848
          %v875 = vpack.c.bf16 %v851, %v850
          %v876 = vpack.c.bf16 %v853, %v852
          %v877 = vpack.c.bf16 %v855, %v854
          %v878 = vpack.c.bf16 %v857, %v856
          %v879 = vpack.c.bf16 %v859, %v858
          %v880 = vpack.c.bf16 %v861, %v860
          %v881 = vpack.c.bf16 %v863, %v862
          %v882 = vpack.c.bf16 %v865, %v864
          %v883 = vpack.c.bf16 %v867, %v866
          %v900 = vunpack.c.l.b16 %v868
          %v901 = vunpack.c.h.b16 %v868
          %v902 = vunpack.c.l.b16 %v869
          %v903 = vunpack.c.h.b16 %v869
          %v904 = vunpack.c.l.b16 %v870
          %v905 = vunpack.c.h.b16 %v870
          %v906 = vunpack.c.l.b16 %v871
          %v907 = vunpack.c.h.b16 %v871
          %v908 = vunpack.c.l.b16 %v872
          %v909 = vunpack.c.h.b16 %v872
          %v910 = vunpack.c.l.b16 %v873
          %v911 = vunpack.c.h.b16 %v873
          %v912 = vunpack.c.l.b16 %v874
          %v913 = vunpack.c.h.b16 %v874
          %v914 = vunpack.c.l.b16 %v875
          %v915 = vunpack.c.h.b16 %v875
          %v916 = vunpack.c.l.b16 %v876
          %v917 = vunpack.c.h.b16 %v876
          %v918 = vunpack.c.l.b16 %v877
          %v919 = vunpack.c.h.b16 %v877
          %v920 = vunpack.c.l.b16 %v878
          %v921 = vunpack.c.h.b16 %v878
          %v922 = vunpack.c.l.b16 %v879
          %v923 = vunpack.c.h.b16 %v879
          %v924 = vunpack.c.l.b16 %v880
          %v925 = vunpack.c.h.b16 %v880
          %v926 = vunpack.c.l.b16 %v881
          %v927 = vunpack.c.h.b16 %v881
          %v928 = vunpack.c.l.b16 %v882
          %v929 = vunpack.c.h.b16 %v882
          %v930 = vunpack.c.l.b16 %v883
          %v931 = vunpack.c.h.b16 %v883
          %v932 = vpack.c.b16 %v900, %v900
          %v933 = vpack.c.b16 %v901, %v901
          %v934 = vpack.c.b16 %v902, %v902
          %v935 = vpack.c.b16 %v903, %v903
          %v936 = vpack.c.b16 %v904, %v904
          %v937 = vpack.c.b16 %v905, %v905
          %v938 = vpack.c.b16 %v906, %v906
          %v939 = vpack.c.b16 %v907, %v907
          %v940 = vpack.c.b16 %v908, %v908
          %v941 = vpack.c.b16 %v909, %v909
          %v942 = vpack.c.b16 %v910, %v910
          %v943 = vpack.c.b16 %v911, %v911
          %v944 = vpack.c.b16 %v912, %v912
          %v945 = vpack.c.b16 %v913, %v913
          %v946 = vpack.c.b16 %v914, %v914
          %v947 = vpack.c.b16 %v915, %v915
          %v948 = vpack.c.b16 %v916, %v916
          %v949 = vpack.c.b16 %v917, %v917
          %v950 = vpack.c.b16 %v918, %v918
          %v951 = vpack.c.b16 %v919, %v919
          %v952 = vpack.c.b16 %v920, %v920
          %v953 = vpack.c.b16 %v921, %v921
          %v954 = vpack.c.b16 %v922, %v922
          %v955 = vpack.c.b16 %v923, %v923
          %v956 = vpack.c.b16 %v924, %v924
          %v957 = vpack.c.b16 %v925, %v925
          %v958 = vpack.c.b16 %v926, %v926
          %v959 = vpack.c.b16 %v927, %v927
          %v960 = vpack.c.b16 %v928, %v928
          %v961 = vpack.c.b16 %v929, %v929
          %v962 = vpack.c.b16 %v930, %v930
          %v963 = vpack.c.b16 %v931, %v931
          %996 = vst [vmem:[%s228] sm:$0xf] %v932
          %997 = vst [vmem:[%s228 + $0x4] sm:$0xf] %v933
          %998 = vst [vmem:[%s228 + $0x8] sm:$0xf] %v934
          %999 = vst [vmem:[%s228 + $0xc] sm:$0xf] %v935
          %1000 = vst [vmem:[%s228 + $0x10] sm:$0xf] %v936
          %1001 = vst [vmem:[%s228 + $0x14] sm:$0xf] %v937
          %1002 = vst [vmem:[%s228 + $0x18] sm:$0xf] %v938
          %1003 = vst [vmem:[%s228 + $0x1c] sm:$0xf] %v939
          %1004 = vst [vmem:[%s228 + $0x20] sm:$0xf] %v940
          %1005 = vst [vmem:[%s228 + $0x24] sm:$0xf] %v941
          %1006 = vst [vmem:[%s228 + $0x28] sm:$0xf] %v942
          %1007 = vst [vmem:[%s228 + $0x2c] sm:$0xf] %v943
          %1008 = vst [vmem:[%s228 + $0x30] sm:$0xf] %v944
          %1009 = vst [vmem:[%s228 + $0x34] sm:$0xf] %v945
          %1010 = vst [vmem:[%s228 + $0x38] sm:$0xf] %v946
          %1011 = vst [vmem:[%s228 + $0x3c] sm:$0xf] %v947
          %1012 = vst [vmem:[%s228 + $0x40] sm:$0xf] %v948
          %1013 = vst [vmem:[%s228 + $0x44] sm:$0xf] %v949
          %1014 = vst [vmem:[%s228 + $0x48] sm:$0xf] %v950
          %1015 = vst [vmem:[%s228 + $0x4c] sm:$0xf] %v951
          %1016 = vst [vmem:[%s228 + $0x50] sm:$0xf] %v952
          %1017 = vst [vmem:[%s228 + $0x54] sm:$0xf] %v953
          %1018 = vst [vmem:[%s228 + $0x58] sm:$0xf] %v954
          %1019 = vst [vmem:[%s228 + $0x5c] sm:$0xf] %v955
          %1020 = vst [vmem:[%s228 + $0x60] sm:$0xf] %v956
          %1021 = vst [vmem:[%s228 + $0x64] sm:$0xf] %v957
          %1022 = vst [vmem:[%s228 + $0x68] sm:$0xf] %v958
          %1023 = vst [vmem:[%s228 + $0x6c] sm:$0xf] %v959
          %1024 = vst [vmem:[%s228 + $0x70] sm:$0xf] %v960
          %1025 = vst [vmem:[%s228 + $0x74] sm:$0xf] %v961
          %1026 = vst [vmem:[%s228 + $0x78] sm:$0xf] %v962
          %1027 = vst [vmem:[%s228 + $0x7c] sm:$0xf] %v963
        $region40: #{tpu_custom_call.1} parent=31 // pred_fallthru
          _
        %s1028 = sand.u32 %s128, 1
        %s1029 = scalar_lea.sflag [#allocation4], %s1028
        %s1030 = sand.u32 %s128, 1
        %s1031 = smul.addr %s1030, 128
        %s1032 = scalar_lea.vmem [#allocation3], %s1031
        // Predicated region
        $region41: #{tpu_custom_call.1} parent=31 // pred_check
          %p1033 = pneg %p138
        $region42: #{tpu_custom_call.1} parent=31 // pred_check_branch
          %1035 = sbr.rel (%p1033) target = $region44
        $region43: #{tpu_custom_call.1} parent=31 // pred_region
          %s1036 = smul.u32 32, %s22
          %s1038 = ssub.s32 2048, 2048
          %1039 = vsyncadd %s1029, %s1038
          %s1040 = sadd.s32 %s23, %s1036
          %s1041 = smul.addr %s1040, 64
          %s1042 = scalar_lea.hbm %s3, %s1041
          %s1043 = sshll.u32 %s1032, 4
          %s1044 = int_to_ptr.vmem [resolvable:$true] %s1043
          %1049 = dma.vmem_to_hbm [thread:$0]  %s1044, 2048, %s1042, %s1029, 64, 64, 4
        $region44: #{tpu_custom_call.1} parent=31 // pred_fallthru
          _
      $region32: #{tpu_custom_call.1} parent=5 // pred_fallthru
        _
      %p1050 = scmp.le.s32.totalorder 2, %s12
      // Predicated region
      $region45: #{tpu_custom_call.1} parent=5 // pred_check
        %p1051 = pneg %p1050
      $region46: #{tpu_custom_call.1} parent=5 // pred_check_branch
        %1053 = sbr.rel (%p1051) target = $region48
      $region47: #{tpu_custom_call.1} parent=5 // pred_region
        %s1054 = ssub.s32 %s12, 2
        // Predicated region
        $region49: #{tpu_custom_call.1} parent=47 // pred_check
          %p1055 = pneg %p144
        $region50: #{tpu_custom_call.1} parent=47 // pred_check_branch
          %1057 = sbr.rel (%p1055) target = $region52
        $region51: #{tpu_custom_call.1} parent=47 // pred_region
          %s1058 = sand.u32 %s129, 1
          %s1059 = scalar_lea.sflag [#allocation4], %s1058
          %s1060 = sand.u32 %s129, 1
          %s1061 = smul.addr %s1060, 128
          %s1062 = scalar_lea.vmem [#allocation3], %s1061
          %1063 = dma.done %s1059, 2048
        $region52: #{tpu_custom_call.1} parent=47 // pred_fallthru
          _
      $region48: #{tpu_custom_call.1} parent=5 // pred_fallthru
        _
    $region6: #{tpu_custom_call.1} parent=1 // loop_footer
      %s16 = sadd.s32 1, %s12
    $region7: #{tpu_custom_call.1} parent=1 // loop_footer_branch
      %11 = sbr.rel target = $region3
    $region8: #{tpu_custom_call.1} parent=1 // loop_exit
      _
    %1064 = vsyncpa [#allocation4], 1
    %s1065 = scalar_lea.sflag [#allocation4], 1
    %1066 = vsyncpa %s1065, 1

// kernel: tpu_custom_call.1
$region0: #{tpu_custom_call.1}
  #allocation0 [shape = 'u32[]', space=smem, size = 0x4, offset = 0x4, fixed_abs, tag = 'smem constant byte address 0x4 - core index']
  #allocation1 [shape = 'u32[144,128]{1,0:T(1,128)}', space=vmem, size = 0x12000, scoped, tag = 'internal scratch']
  #allocation2 [shape = 'f32[256,128]{1,0:T(8,128)}', space=vmem, size = 0x20000, scoped, tag = 'scratch operand']
  %s0 = inlined_call_operand.vmem [shape: bf16[512,36], index: 0, kind: input, shape index: {}]
  %s1 = inlined_call_operand.vmem [shape: bf16[36,128], index: 1, kind: input, shape index: {}]
  %s2 = inlined_call_operand.vmem [shape: f32[1,128], index: 2, kind: input, shape index: {}]
  %s3 = inlined_call_operand.hbm [shape: bf16[512,128], index: 3, kind: output, shape index: {}]
  %s4 = sld [smem:[#allocation0]]
  $region53: #{tpu_custom_call.1} parent=0
    _
  %s6 = ssub.s32 1, %s4
  %s7 = scalar_select 0, %s6, %s4
  $region1: #{tpu_custom_call.1} parent=0
    #allocation3 [shape = 'u8[131072]{0}', space=vmem, size = 0x20000, scoped, tag = 'output window, operand 0']
    #allocation4 [shape = 's32[2]{0}', space=sflag, size = 0x8, scoped, tag = 'scoped memory for tpu_custom_call.1']
    %8 = vsyncpa [#allocation4], 0
    %s9 = scalar_lea.sflag [#allocation4], 1
    %10 = vsyncpa %s9, 0
    loop: start=0, step=1, limit=4
    $region2: #{tpu_custom_call.1} parent=1 // loop_pre_header
      _
    $region3: #{tpu_custom_call.1} parent=1 // loop_header
      %s12 = sphi 0, %s16
      %p13 = scmp.ge.s32.totalorder %s12, 4
      %s19 = sphi 0, %s38
      %s20 = sphi 0, %s34
      %s21 = sphi 0, %s30
      %s22 = sphi 0, %s19
      %s23 = sphi 0, %s20
      %s24 = sphi 0, %s21
      %s25 = sphi 0, %s22
      %s26 = sphi 0, %s23
      %s27 = sphi 0, %s24
      %s43 = sphi 0, %s45
      %s46 = sphi 0, %s43
      %s47 = sphi 0, %s46
      %s63 = sphi 0, %s47
      %s71 = sphi 0, %s73
      %s74 = sphi 0, %s71
      %s75 = sphi 0, %s74
      %s91 = sphi 0, %s75
      %s97 = sphi 0, %s99
      %s100 = sphi 0, %s97
      %s101 = sphi 0, %s100
      %s117 = sphi 0, %s101
      %s125 = sphi 0, %s127
      %s128 = sphi 0, %s125
      %s129 = sphi 0, %s128
      %s145 = sphi 0, %s129
    $region4: #{tpu_custom_call.1} parent=1 // loop_header_branch
      %15 = sbr.rel (%p13) target = $region8
    $region5: #{tpu_custom_call.1} parent=1 // loop_body
      %s17 = ssub.s32 %s12, 1
      %s18 = ssub.s32 %s12, 2
      %s28 = sadd.s32 1, %s21
      %p29 = scmp.ge.s32.totalorder %s28, 1
      %s30 = scalar_select %p29, 0, %s28
      %s31 = sadd.s32 1, %s20
      %s32 = scalar_select %p29, %s31, %s20
      %p33 = scmp.ge.s32.totalorder %s32, 1
      %s34 = scalar_select %p33, 0, %s32
      %s35 = sadd.s32 1, %s19
      %s36 = scalar_select %p33, %s35, %s19
      %p37 = scmp.ge.s32.totalorder %s36, 2
      %s38 = scalar_select %p37, 0, %s36
      %s39 = ssub.s32 %s19, %s38
      %s40 = ssub.s32 %s21, %s30
      %s41 = sor.u32 %s39, %s40
      %p42 = scmp.eq.s32.totalorder %s41, 0
      %s44 = sadd.s32 %s43, 1
      %s45 = scalar_select %p42, %s43, %s44
      %p48 = pneg %p42
      %p49 = scmp.eq.s32.totalorder %s12, 1
      %p50 = por %p48, %p49
      %p51 = scmp.ne.s32.totalorder %s43, %s46
      %p52 = scmp.eq.s32.totalorder %s12, 0
      %p53 = por %p51, %p52
      %p54 = scmp.ne.s32.totalorder %s43, %s46
      %p55 = scmp.eq.s32.totalorder %s17, 1
      %p56 = por %p54, %p55
      %p57 = scmp.ne.s32.totalorder %s46, %s47
      %p58 = scmp.eq.s32.totalorder %s17, 0
      %p59 = por %p57, %p58
      %p60 = scmp.ne.s32.totalorder %s46, %s47
      %p61 = scmp.eq.s32.totalorder %s18, 1
      %p62 = por %p60, %p61
      %p64 = scmp.ne.s32.totalorder %s47, %s63
      %p65 = scmp.eq.s32.totalorder %s18, 0
      %p66 = por %p64, %p65
      %s67 = ssub.s32 %s21, %s30
      %s68 = ssub.s32 %s20, %s34
      %s69 = sor.u32 %s67, %s68
      %p70 = scmp.eq.s32.totalorder %s69, 0
      %s72 = sadd.s32 %s71, 1
      %s73 = scalar_select %p70, %s71, %s72
      %p76 = pneg %p70
      %p77 = scmp.eq.s32.totalorder %s12, 1
      %p78 = por %p76, %p77
      %p79 = scmp.ne.s32.totalorder %s71, %s74
      %p80 = scmp.eq.s32.totalorder %s12, 0
      %p81 = por %p79, %p80
      %p82 = scmp.ne.s32.totalorder %s71, %s74
      %p83 = scmp.eq.s32.totalorder %s17, 1
      %p84 = por %p82, %p83
      %p85 = scmp.ne.s32.totalorder %s74, %s75
      %p86 = scmp.eq.s32.totalorder %s17, 0
      %p87 = por %p85, %p86
      %p88 = scmp.ne.s32.totalorder %s74, %s75
      %p89 = scmp.eq.s32.totalorder %s18, 1
      %p90 = por %p88, %p89
      %p92 = scmp.ne.s32.totalorder %s75, %s91
      %p93 = scmp.eq.s32.totalorder %s18, 0
      %p94 = por %p92, %p93
      %s95 = ssub.s32 %s20, %s34
      %p96 = scmp.eq.s32.totalorder %s95, 0
      %s98 = sadd.s32 %s97, 1
      %s99 = scalar_select %p96, %s97, %s98
      %p102 = pneg %p96
      %p103 = scmp.eq.s32.totalorder %s12, 1
      %p104 = por %p102, %p103
      %p105 = scmp.ne.s32.totalorder %s97, %s100
      %p106 = scmp.eq.s32.totalorder %s12, 0
      %p107 = por %p105, %p106
      %p108 = scmp.ne.s32.totalorder %s97, %s100
      %p109 = scmp.eq.s32.totalorder %s17, 1
      %p110 = por %p108, %p109
      %p111 = scmp.ne.s32.totalorder %s100, %s101
      %p112 = scmp.eq.s32.totalorder %s17, 0
      %p113 = por %p111, %p112
      %p114 = scmp.ne.s32.totalorder %s100, %s101
      %p115 = scmp.eq.s32.totalorder %s18, 1
      %p116 = por %p114, %p115
      %p118 = scmp.ne.s32.totalorder %s101, %s117
      %p119 = scmp.eq.s32.totalorder %s18, 0
      %p120 = por %p118, %p119
      %s121 = ssub.s32 %s19, %s38
      %s122 = ssub.s32 %s20, %s34
      %s123 = sor.u32 %s121, %s122
      %p124 = scmp.eq.s32.totalorder %s123, 0
      %s126 = sadd.s32 %s125, 1
      %s127 = scalar_select %p124, %s125, %s126
      %p130 = pneg %p124
      %p131 = scmp.eq.s32.totalorder %s12, 1
      %p132 = por %p130, %p131
      %p133 = scmp.ne.s32.totalorder %s125, %s128
      %p134 = scmp.eq.s32.totalorder %s12, 0
      %p135 = por %p133, %p134
      %p136 = scmp.ne.s32.totalorder %s125, %s128
      %p137 = scmp.eq.s32.totalorder %s17, 1
      %p138 = por %p136, %p137
      %p139 = scmp.ne.s32.totalorder %s128, %s129
      %p140 = scmp.eq.s32.totalorder %s17, 0
      %p141 = por %p139, %p140
      %p142 = scmp.ne.s32.totalorder %s128, %s129
      %p143 = scmp.eq.s32.totalorder %s18, 1
      %p144 = por %p142, %p143
      %p146 = scmp.ne.s32.totalorder %s129, %s145
      %p147 = scmp.eq.s32.totalorder %s18, 0
      %p148 = por %p146, %p147
      %p149 = scmp.le.s32.totalorder 1, %s12
      %p150 = scmp.lt.s32.totalorder %s12, 3
      %p151 = pnand %p149, %p150
      %p152 = pneg %p151
      // Predicated region
      $region9: #{tpu_custom_call.1} parent=5 // pred_check
        _
      $region10: #{tpu_custom_call.1} parent=5 // pred_check_branch
        %154 = sbr.rel (%p151) target = $region12
      $region11: #{tpu_custom_call.1} parent=5 // pred_region
        %s155 = ssub.s32 %s12, 1
        // Predicated region
        $region13: #{tpu_custom_call.1} parent=11 // pred_check
          %p156 = pneg %p87
        $region14: #{tpu_custom_call.1} parent=11 // pred_check_branch
          %158 = sbr.rel (%p156) target = $region16
        $region15: #{tpu_custom_call.1} parent=11 // pred_region
          %s159 = smul.u32 5, %s24
          %p160 = scmp.lt.s32.totalorder %s159, 4
          %s161 = scalar_select %p160, %s159, 4
          %p162 = scmp.lt.s32.totalorder %s23, 0
          %s163 = scalar_select %p162, %s23, 0
          %s164 = sadd.s32 %s163, %s161
          %s165 = smul.addr %s164, 4
          %s166 = scalar_lea.vmem %s1, %s165
          %s167 = smul.u32 5, %s24
        $region16: #{tpu_custom_call.1} parent=11 // pred_fallthru
          _
        // Predicated region
        $region17: #{tpu_custom_call.1} parent=11 // pred_check
          %p168 = pneg %p113
        $region18: #{tpu_custom_call.1} parent=11 // pred_check_branch
          %170 = sbr.rel (%p168) target = $region20
        $region19: #{tpu_custom_call.1} parent=11 // pred_region
          %p171 = scmp.lt.s32.totalorder %s23, 0
          %s172 = scalar_select %p171, %s23, 0
          %s173 = scalar_lea.vmem %s2, %s172
        $region20: #{tpu_custom_call.1} parent=11 // pred_fallthru
          _
      $region12: #{tpu_custom_call.1} parent=5 // pred_fallthru
        _
      %p174 = scmp.lt.s32.totalorder %s12, 2
      // Predicated region
      $region21: #{tpu_custom_call.1} parent=5 // pred_check
        %p175 = pneg %p174
      $region22: #{tpu_custom_call.1} parent=5 // pred_check_branch
        %177 = sbr.rel (%p175) target = $region24
      $region23: #{tpu_custom_call.1} parent=5 // pred_region
        // Predicated region
        $region25: #{tpu_custom_call.1} parent=23 // pred_check
          %p178 = pneg %p53
        $region26: #{tpu_custom_call.1} parent=23 // pred_check_branch
          %180 = sbr.rel (%p178) target = $region28
        $region27: #{tpu_custom_call.1} parent=23 // pred_region
          %s181 = smul.u32 32, %s19
          %p182 = scmp.lt.s32.totalorder %s181, 63
          %s183 = scalar_select %p182, %s181, 63
          %p184 = scmp.lt.s32.totalorder %s21, 0
          %s185 = scalar_select %p184, %s21, 0
          %s186 = sadd.s32 %s185, %s183
          %s187 = smul.addr %s186, 4
          %s188 = scalar_lea.vmem %s0, %s187
          %s189 = smul.u32 32, %s19
        $region28: #{tpu_custom_call.1} parent=23 // pred_fallthru
          _
      $region24: #{tpu_custom_call.1} parent=5 // pred_fallthru
        _
      %p190 = scmp.le.s32.totalorder 1, %s12
      %p191 = scmp.lt.s32.totalorder %s12, 3
      %p192 = pnand %p190, %p191
      %p193 = pneg %p192
      // Predicated region
      $region29: #{tpu_custom_call.1} parent=5 // pred_check
        _
      $region30: #{tpu_custom_call.1} parent=5 // pred_check_branch
        %195 = sbr.rel (%p192) target = $region32
      $region31: #{tpu_custom_call.1} parent=5 // pred_region
        %s196 = ssub.s32 %s12, 1
        %s197 = smul.u32 32, %s22
        %p198 = scmp.lt.s32.totalorder %s197, 63
        %s199 = scalar_select %p198, %s197, 63
        %p200 = scmp.lt.s32.totalorder %s24, 0
        %s201 = scalar_select %p200, %s24, 0
        %s202 = sadd.s32 %s201, %s199
        %s203 = smul.addr %s202, 4
        %s204 = scalar_lea.vmem %s0, %s203
        %p205 = pneg %p59
        %p206 = pneg %p56
        %s207 = smul.u32 5, %s24
        %p208 = scmp.lt.s32.totalorder %s207, 4
        %s209 = scalar_select %p208, %s207, 4
        %p210 = scmp.lt.s32.totalorder %s23, 0
        %s211 = scalar_select %p210, %s23, 0
        %s212 = sadd.s32 %s211, %s209
        %s213 = smul.addr %s212, 4
        %s214 = scalar_lea.vmem %s1, %s213
        %p215 = pneg %p87
        %p216 = pneg %p84
        %p217 = scmp.lt.s32.totalorder %s23, 0
        %s218 = scalar_select %p217, %s23, 0
        %s219 = scalar_lea.vmem %s2, %s218
        %p220 = pneg %p113
        %p221 = pneg %p110
        %p222 = pneg %p141
        %p223 = pneg %p138
        %s224 = sand.u32 %s128, 1
        %s225 = scalar_lea.sflag [#allocation4], %s224
        %s226 = sand.u32 %s128, 1
        %s227 = smul.addr %s226, 128
        %s228 = scalar_lea.vmem [#allocation3], %s227
        %s229 = smul.u32 32, %s22
        %p230 = scmp.lt.s32.totalorder %s229, 63
        %s231 = scalar_select %p230, %s229, 63
        %p232 = scmp.lt.s32.totalorder %s24, 0
        %s233 = scalar_select %p232, %s24, 0
        %s234 = sadd.s32 %s233, %s231
        %s235 = smul.addr %s234, 4
        %s236 = scalar_lea.vmem %s0, %s235
        %s237 = smul.u32 32, %s22
        %s238 = smul.u32 5, %s24
        %p239 = scmp.lt.s32.totalorder %s238, 4
        %s240 = scalar_select %p239, %s238, 4
        %p241 = scmp.lt.s32.totalorder %s23, 0
        %s242 = scalar_select %p241, %s23, 0
        %s243 = sadd.s32 %s242, %s240
        %s244 = smul.addr %s243, 4
        %s245 = scalar_lea.vmem %s1, %s244
        %s246 = smul.u32 5, %s24
        %p247 = scmp.lt.s32.totalorder %s23, 0
        %s248 = scalar_select %p247, %s23, 0
        %s249 = scalar_lea.vmem %s2, %s248
        %s250 = smul.u32 32, %s22
        %p252 = scmp.eq.s32.totalorder %s24, 0
        // Predicated region
        $region33: #{tpu_custom_call.1} parent=31 // pred_check
          %p253 = pneg %p252
        $region34: #{tpu_custom_call.1} parent=31 // pred_check_branch
          %255 = sbr.rel (%p253) target = $region36
        $region35: #{tpu_custom_call.1} parent=31 // pred_region
          %256 = vst [vmem:[#allocation2] sm:$0xff] 0.0
          %257 = vst [vmem:[#allocation2 + $0x8] sm:$0xff] 0.0
          %258 = vst [vmem:[#allocation2 + $0x10] sm:$0xff] 0.0
          %259 = vst [vmem:[#allocation2 + $0x18] sm:$0xff] 0.0
          %260 = vst [vmem:[#allocation2 + $0x20] sm:$0xff] 0.0
          %261 = vst [vmem:[#allocation2 + $0x28] sm:$0xff] 0.0
          %262 = vst [vmem:[#allocation2 + $0x30] sm:$0xff] 0.0
          %263 = vst [vmem:[#allocation2 + $0x38] sm:$0xff] 0.0
          %264 = vst [vmem:[#allocation2 + $0x40] sm:$0xff] 0.0
          %265 = vst [vmem:[#allocation2 + $0x48] sm:$0xff] 0.0
          %266 = vst [vmem:[#allocation2 + $0x50] sm:$0xff] 0.0
          %267 = vst [vmem:[#allocation2 + $0x58] sm:$0xff] 0.0
          %268 = vst [vmem:[#allocation2 + $0x60] sm:$0xff] 0.0
          %269 = vst [vmem:[#allocation2 + $0x68] sm:$0xff] 0.0
          %270 = vst [vmem:[#allocation2 + $0x70] sm:$0xff] 0.0
          %271 = vst [vmem:[#allocation2 + $0x78] sm:$0xff] 0.0
          %272 = vst [vmem:[#allocation2 + $0x80] sm:$0xff] 0.0
          %273 = vst [vmem:[#allocation2 + $0x88] sm:$0xff] 0.0
          %274 = vst [vmem:[#allocation2 + $0x90] sm:$0xff] 0.0
          %275 = vst [vmem:[#allocation2 + $0x98] sm:$0xff] 0.0
          %276 = vst [vmem:[#allocation2 + $0xa0] sm:$0xff] 0.0
          %277 = vst [vmem:[#allocation2 + $0xa8] sm:$0xff] 0.0
          %278 = vst [vmem:[#allocation2 + $0xb0] sm:$0xff] 0.0
          %279 = vst [vmem:[#allocation2 + $0xb8] sm:$0xff] 0.0
          %280 = vst [vmem:[#allocation2 + $0xc0] sm:$0xff] 0.0
          %281 = vst [vmem:[#allocation2 + $0xc8] sm:$0xff] 0.0
          %282 = vst [vmem:[#allocation2 + $0xd0] sm:$0xff] 0.0
          %283 = vst [vmem:[#allocation2 + $0xd8] sm:$0xff] 0.0
          %284 = vst [vmem:[#allocation2 + $0xe0] sm:$0xff] 0.0
          %285 = vst [vmem:[#allocation2 + $0xe8] sm:$0xff] 0.0
          %286 = vst [vmem:[#allocation2 + $0xf0] sm:$0xff] 0.0
          %287 = vst [vmem:[#allocation2 + $0xf8] sm:$0xff] 0.0
        $region36: #{tpu_custom_call.1} parent=31 // pred_fallthru
          _
        %v288 = vld [vmem:[#allocation2] sm:$0xff]
        %v289 = vld [vmem:[#allocation2 + $0x8] sm:$0xff]
        %v290 = vld [vmem:[#allocation2 + $0x10] sm:$0xff]
        %v291 = vld [vmem:[#allocation2 + $0x18] sm:$0xff]
        %v292 = vld [vmem:[#allocation2 + $0x20] sm:$0xff]
        %v293 = vld [vmem:[#allocation2 + $0x28] sm:$0xff]
        %v294 = vld [vmem:[#allocation2 + $0x30] sm:$0xff]
        %v295 = vld [vmem:[#allocation2 + $0x38] sm:$0xff]
        %v296 = vld [vmem:[#allocation2 + $0x40] sm:$0xff]
        %v297 = vld [vmem:[#allocation2 + $0x48] sm:$0xff]
        %v298 = vld [vmem:[#allocation2 + $0x50] sm:$0xff]
        %v299 = vld [vmem:[#allocation2 + $0x58] sm:$0xff]
        %v300 = vld [vmem:[#allocation2 + $0x60] sm:$0xff]
        %v301 = vld [vmem:[#allocation2 + $0x68] sm:$0xff]
        %v302 = vld [vmem:[#allocation2 + $0x70] sm:$0xff]
        %v303 = vld [vmem:[#allocation2 + $0x78] sm:$0xff]
        %v304 = vld [vmem:[#allocation2 + $0x80] sm:$0xff]
        %v305 = vld [vmem:[#allocation2 + $0x88] sm:$0xff]
        %v306 = vld [vmem:[#allocation2 + $0x90] sm:$0xff]
        %v307 = vld [vmem:[#allocation2 + $0x98] sm:$0xff]
        %v308 = vld [vmem:[#allocation2 + $0xa0] sm:$0xff]
        %v309 = vld [vmem:[#allocation2 + $0xa8] sm:$0xff]
        %v310 = vld [vmem:[#allocation2 + $0xb0] sm:$0xff]
        %v311 = vld [vmem:[#allocation2 + $0xb8] sm:$0xff]
        %v312 = vld [vmem:[#allocation2 + $0xc0] sm:$0xff]
        %v313 = vld [vmem:[#allocation2 + $0xc8] sm:$0xff]
        %v314 = vld [vmem:[#allocation2 + $0xd0] sm:$0xff]
        %v315 = vld [vmem:[#allocation2 + $0xd8] sm:$0xff]
        %v316 = vld [vmem:[#allocation2 + $0xe0] sm:$0xff]
        %v317 = vld [vmem:[#allocation2 + $0xe8] sm:$0xff]
        %v318 = vld [vmem:[#allocation2 + $0xf0] sm:$0xff]
        %v319 = vld [vmem:[#allocation2 + $0xf8] sm:$0xff]
        %v320 = vld [vmem:[%s236] sm:$0xf]
        %v321 = vld [vmem:[%s236 + $0x4] sm:$0xf]
        %v322 = vld [vmem:[%s236 + $0x8] sm:$0xf]
        %v323 = vld [vmem:[%s236 + $0xc] sm:$0xf]
        %v324 = vld [vmem:[%s236 + $0x10] sm:$0xf]
        %v325 = vld [vmem:[%s236 + $0x14] sm:$0xf]
        %v326 = vld [vmem:[%s236 + $0x18] sm:$0xf]
        %v327 = vld [vmem:[%s236 + $0x1c] sm:$0xf]
        %v328 = vld [vmem:[%s236 + $0x20] sm:$0xf]
        %v329 = vld [vmem:[%s236 + $0x24] sm:$0xf]
        %v330 = vld [vmem:[%s236 + $0x28] sm:$0xf]
        %v331 = vld [vmem:[%s236 + $0x2c] sm:$0xf]
        %v332 = vld [vmem:[%s236 + $0x30] sm:$0xf]
        %v333 = vld [vmem:[%s236 + $0x34] sm:$0xf]
        %v334 = vld [vmem:[%s236 + $0x38] sm:$0xf]
        %v335 = vld [vmem:[%s236 + $0x3c] sm:$0xf]
        %v336 = vld [vmem:[%s236 + $0x40] sm:$0xf]
        %v337 = vld [vmem:[%s236 + $0x44] sm:$0xf]
        %v338 = vld [vmem:[%s236 + $0x48] sm:$0xf]
        %v339 = vld [vmem:[%s236 + $0x4c] sm:$0xf]
        %v340 = vld [vmem:[%s236 + $0x50] sm:$0xf]
        %v341 = vld [vmem:[%s236 + $0x54] sm:$0xf]
        %v342 = vld [vmem:[%s236 + $0x58] sm:$0xf]
        %v343 = vld [vmem:[%s236 + $0x5c] sm:$0xf]
        %v344 = vld [vmem:[%s236 + $0x60] sm:$0xf]
        %v345 = vld [vmem:[%s236 + $0x64] sm:$0xf]
        %v346 = vld [vmem:[%s236 + $0x68] sm:$0xf]
        %v347 = vld [vmem:[%s236 + $0x6c] sm:$0xf]
        %v348 = vld [vmem:[%s236 + $0x70] sm:$0xf]
        %v349 = vld [vmem:[%s236 + $0x74] sm:$0xf]
        %v350 = vld [vmem:[%s236 + $0x78] sm:$0xf]
        %v351 = vld [vmem:[%s236 + $0x7c] sm:$0xf]
        %v352 = vld [vmem:[%s245] sm:$0xf]
        %v353 = vld [vmem:[%s245 + $0x4] sm:$0xf]
        %v354 = vld [vmem:[%s245 + $0x8] sm:$0xf]
        %v355 = vld [vmem:[%s245 + $0xc] sm:$0xf]
        %v356 = vld [vmem:[%s245 + $0x10] sm:$0x3]
        %v389 = vunpack.c.l.b16 %v320
        %v390 = vunpack.c.l.b16 %v321
        %v391 = vunpack.c.l.b16 %v322
        %v392 = vunpack.c.l.b16 %v323
        %v393 = vunpack.c.l.b16 %v324
        %v394 = vunpack.c.l.b16 %v325
        %v395 = vunpack.c.l.b16 %v326
        %v396 = vunpack.c.l.b16 %v327
        %v397 = vunpack.c.l.b16 %v328
        %v398 = vunpack.c.l.b16 %v329
        %v399 = vunpack.c.l.b16 %v330
        %v400 = vunpack.c.l.b16 %v331
        %v401 = vunpack.c.l.b16 %v332
        %v402 = vunpack.c.l.b16 %v333
        %v403 = vunpack.c.l.b16 %v334
        %v404 = vunpack.c.l.b16 %v335
        %v405 = vunpack.c.l.b16 %v336
        %v406 = vunpack.c.l.b16 %v337
        %v407 = vunpack.c.l.b16 %v338
        %v408 = vunpack.c.l.b16 %v339
        %v409 = vunpack.c.l.b16 %v340
        %v410 = vunpack.c.l.b16 %v341
        %v411 = vunpack.c.l.b16 %v342
        %v412 = vunpack.c.l.b16 %v343
        %v413 = vunpack.c.l.b16 %v344
        %v414 = vunpack.c.l.b16 %v345
        %v415 = vunpack.c.l.b16 %v346
        %v416 = vunpack.c.l.b16 %v347
        %v417 = vunpack.c.l.b16 %v348
        %v418 = vunpack.c.l.b16 %v349
        %v419 = vunpack.c.l.b16 %v350
        %v420 = vunpack.c.l.b16 %v351
        %v421 = vpack.c.b16 %v390, %v389
        %v422 = vpack.c.b16 %v392, %v391
        %v423 = vpack.c.b16 %v394, %v393
        %v424 = vpack.c.b16 %v396, %v395
        %v425 = vpack.c.b16 %v398, %v397
        %v426 = vpack.c.b16 %v400, %v399
        %v427 = vpack.c.b16 %v402, %v401
        %v428 = vpack.c.b16 %v404, %v403
        %v429 = vpack.c.b16 %v406, %v405
        %v430 = vpack.c.b16 %v408, %v407
        %v431 = vpack.c.b16 %v410, %v409
        %v432 = vpack.c.b16 %v412, %v411
        %v433 = vpack.c.b16 %v414, %v413
        %v434 = vpack.c.b16 %v416, %v415
        %v435 = vpack.c.b16 %v418, %v417
        %v436 = vpack.c.b16 %v420, %v419
        %v442 = vunpack.c.l.b16 %v352
        %v443 = vunpack.c.l.b16 %v353
        %v444 = vunpack.c.l.b16 %v354
        %v445 = vunpack.c.l.b16 %v355
        %v446 = vunpack.c.l.b16 %v356
        %v447 = vpack.c.b16 %v443, %v442
        %v448 = vpack.c.b16 %v445, %v444
        %v449 = vpack.c.b16 %v446, %v446
        %vm452 = vcmask 293888
        %v454 = vsel %vm452, %v421, 0
        %v457 = vsel %vm452, %v422, 0
        %v460 = vsel %vm452, %v423, 0
        %v463 = vsel %vm452, %v424, 0
        %v466 = vsel %vm452, %v425, 0
        %v469 = vsel %vm452, %v426, 0
        %v472 = vsel %vm452, %v427, 0
        %v475 = vsel %vm452, %v428, 0
        %v478 = vsel %vm452, %v429, 0
        %v481 = vsel %vm452, %v430, 0
        %v484 = vsel %vm452, %v431, 0
        %v487 = vsel %vm452, %v432, 0
        %v490 = vsel %vm452, %v433, 0
        %v493 = vsel %vm452, %v434, 0
        %v496 = vsel %vm452, %v435, 0
        %v499 = vsel %vm452, %v436, 0
        %vm501 = vcmask 1041408
        %v503 = vsel %vm501, %v449, 0
        %505 = vmatprep.subr.bf16.mxu0 0
        %506 = vmatpush1.bf16.msra.mxu0 %v447
        %507 = vmatprep.subr.bf16.mxu0 0
        %508 = vmatpush1.bf16.msra.mxu0 %v448
        %509 = vmatprep.subr.bf16.mxu0 0
        %510 = vmatpush1.bf16.msra.mxu0 %v503
        %511 = vmatprep.subr.bf16.mxu0 0
        %512 = vmatpush1.bf16.msra.mxu0 0
        %513 = vmatprep.subr.bf16.mxu0 0
        %514 = vmatpush1.bf16.msra.mxu0 0
        %515 = vmatprep.subr.bf16.mxu0 0
        %516 = vmatpush1.bf16.msra.mxu0 0
        %517 = vmatprep.subr.bf16.mxu0 0
        %518 = vmatpush1.bf16.msra.mxu0 0
        %519 = vmatprep.subr.bf16.mxu0 0
        %520 = vmatpush1.bf16.msra.mxu0 0
        %521 = vmatprep.subr.bf16.mxu0 0
        %522 = vmatpush1.bf16.msra.mxu0 0
        %523 = vmatprep.subr.bf16.mxu0 0
        %524 = vmatpush1.bf16.msra.mxu0 0
        %525 = vmatprep.subr.bf16.mxu0 0
        %526 = vmatpush1.bf16.msra.mxu0 0
        %527 = vmatprep.subr.bf16.mxu0 0
        %528 = vmatpush1.bf16.msra.mxu0 0
        %529 = vmatprep.subr.bf16.mxu0 0
        %530 = vmatpush1.bf16.msra.mxu0 0
        %531 = vmatprep.subr.bf16.mxu0 0
        %532 = vmatpush1.bf16.msra.mxu0 0
        %533 = vmatprep.subr.bf16.mxu0 0
        %534 = vmatpush1.bf16.msra.mxu0 0
        %535 = vmatprep.subr.bf16.mxu0 0
        %536 = vmatpush1.bf16.msra.mxu0 0
        %537 = vmatprep.mubr.bf16.mxu0 0
        %538 = vmatmul.mubr.bf16.gmra.mrb[0].mxu0 %v454
        %v539 = vpop.f32.mrb[0].mxu0
        %v540 = vadd.f32 0.0, %v539
        %v541 = vpop.f32.mrb[0].mxu0
        %v542 = vpop.f32.mrb[0].mxu0
        %v543 = vadd.f32 0.0, %v542
        %v544 = vpop.f32.mrb[0].mxu0
        %545 = vmatprep.mubr.bf16.mxu0 0
        %546 = vmatmul.mubr.bf16.gmra.mrb[0].mxu0 %v457
        %v547 = vpop.f32.mrb[0].mxu0
        %v548 = vadd.f32 0.0, %v547
        %v549 = vpop.f32.mrb[0].mxu0
        %v550 = vpop.f32.mrb[0].mxu0
        %v551 = vadd.f32 0.0, %v550
        %v552 = vpop.f32.mrb[0].mxu0
        %553 = vmatprep.mubr.bf16.mxu0 0
        %554 = vmatmul.mubr.bf16.gmra.mrb[0].mxu0 %v460
        %v555 = vpop.f32.mrb[0].mxu0
        %v556 = vadd.f32 0.0, %v555
        %v557 = vpop.f32.mrb[0].mxu0
        %v558 = vpop.f32.mrb[0].mxu0
        %v559 = vadd.f32 0.0, %v558
        %v560 = vpop.f32.mrb[0].mxu0
        %561 = vmatprep.mubr.bf16.mxu0 0
        %562 = vmatmul.mubr.bf16.gmra.mrb[0].mxu0 %v463
        %v563 = vpop.f32.mrb[0].mxu0
        %v564 = vadd.f32 0.0, %v563
        %v565 = vpop.f32.mrb[0].mxu0
        %v566 = vpop.f32.mrb[0].mxu0
        %v567 = vadd.f32 0.0, %v566
        %v568 = vpop.f32.mrb[0].mxu0
        %569 = vmatprep.mubr.bf16.mxu0 0
        %570 = vmatmul.mubr.bf16.gmra.mrb[0].mxu0 %v466
        %v571 = vpop.f32.mrb[0].mxu0
        %v572 = vadd.f32 0.0, %v571
        %v573 = vpop.f32.mrb[0].mxu0
        %v574 = vpop.f32.mrb[0].mxu0
        %v575 = vadd.f32 0.0, %v574
        %v576 = vpop.f32.mrb[0].mxu0
        %577 = vmatprep.mubr.bf16.mxu0 0
        %578 = vmatmul.mubr.bf16.gmra.mrb[0].mxu0 %v469
        %v579 = vpop.f32.mrb[0].mxu0
        %v580 = vadd.f32 0.0, %v579
        %v581 = vpop.f32.mrb[0].mxu0
        %v582 = vpop.f32.mrb[0].mxu0
        %v583 = vadd.f32 0.0, %v582
        %v584 = vpop.f32.mrb[0].mxu0
        %585 = vmatprep.mubr.bf16.mxu0 0
        %586 = vmatmul.mubr.bf16.gmra.mrb[0].mxu0 %v472
        %v587 = vpop.f32.mrb[0].mxu0
        %v588 = vadd.f32 0.0, %v587
        %v589 = vpop.f32.mrb[0].mxu0
        %v590 = vpop.f32.mrb[0].mxu0
        %v591 = vadd.f32 0.0, %v590
        %v592 = vpop.f32.mrb[0].mxu0
        %593 = vmatprep.mubr.bf16.mxu0 0
        %594 = vmatmul.mubr.bf16.gmra.mrb[0].mxu0 %v475
        %v595 = vpop.f32.mrb[0].mxu0
        %v596 = vadd.f32 0.0, %v595
        %v597 = vpop.f32.mrb[0].mxu0
        %v598 = vpop.f32.mrb[0].mxu0
        %v599 = vadd.f32 0.0, %v598
        %v600 = vpop.f32.mrb[0].mxu0
        %601 = vmatprep.mubr.bf16.mxu0 0
        %602 = vmatmul.mubr.bf16.gmra.mrb[0].mxu0 %v478
        %v603 = vpop.f32.mrb[0].mxu0
        %v604 = vadd.f32 0.0, %v603
        %v605 = vpop.f32.mrb[0].mxu0
        %v606 = vpop.f32.mrb[0].mxu0
        %v607 = vadd.f32 0.0, %v606
        %v608 = vpop.f32.mrb[0].mxu0
        %609 = vmatprep.mubr.bf16.mxu0 0
        %610 = vmatmul.mubr.bf16.gmra.mrb[0].mxu0 %v481
        %v611 = vpop.f32.mrb[0].mxu0
        %v612 = vadd.f32 0.0, %v611
        %v613 = vpop.f32.mrb[0].mxu0
        %v614 = vpop.f32.mrb[0].mxu0
        %v615 = vadd.f32 0.0, %v614
        %v616 = vpop.f32.mrb[0].mxu0
        %617 = vmatprep.mubr.bf16.mxu0 0
        %618 = vmatmul.mubr.bf16.gmra.mrb[0].mxu0 %v484
        %v619 = vpop.f32.mrb[0].mxu0
        %v620 = vadd.f32 0.0, %v619
        %v621 = vpop.f32.mrb[0].mxu0
        %v622 = vpop.f32.mrb[0].mxu0
        %v623 = vadd.f32 0.0, %v622
        %v624 = vpop.f32.mrb[0].mxu0
        %625 = vmatprep.mubr.bf16.mxu0 0
        %626 = vmatmul.mubr.bf16.gmra.mrb[0].mxu0 %v487
        %v627 = vpop.f32.mrb[0].mxu0
        %v628 = vadd.f32 0.0, %v627
        %v629 = vpop.f32.mrb[0].mxu0
        %v630 = vpop.f32.mrb[0].mxu0
        %v631 = vadd.f32 0.0, %v630
        %v632 = vpop.f32.mrb[0].mxu0
        %633 = vmatprep.mubr.bf16.mxu0 0
        %634 = vmatmul.mubr.bf16.gmra.mrb[0].mxu0 %v490
        %v635 = vpop.f32.mrb[0].mxu0
        %v636 = vadd.f32 0.0, %v635
        %v637 = vpop.f32.mrb[0].mxu0
        %v638 = vpop.f32.mrb[0].mxu0
        %v639 = vadd.f32 0.0, %v638
        %v640 = vpop.f32.mrb[0].mxu0
        %641 = vmatprep.mubr.bf16.mxu0 0
        %642 = vmatmul.mubr.bf16.gmra.mrb[0].mxu0 %v493
        %v643 = vpop.f32.mrb[0].mxu0
        %v644 = vadd.f32 0.0, %v643
        %v645 = vpop.f32.mrb[0].mxu0
        %v646 = vpop.f32.mrb[0].mxu0
        %v647 = vadd.f32 0.0, %v646
        %v648 = vpop.f32.mrb[0].mxu0
        %649 = vmatprep.mubr.bf16.mxu0 0
        %650 = vmatmul.mubr.bf16.gmra.mrb[0].mxu0 %v496
        %v651 = vpop.f32.mrb[0].mxu0
        %v652 = vadd.f32 0.0, %v651
        %v653 = vpop.f32.mrb[0].mxu0
        %v654 = vpop.f32.mrb[0].mxu0
        %v655 = vadd.f32 0.0, %v654
        %v656 = vpop.f32.mrb[0].mxu0
        %657 = vmatprep.mubr.bf16.mxu0 0
        %658 = vmatmul.mubr.bf16.gmra.mrb[0].mxu0 %v499
        %v659 = vpop.f32.mrb[0].mxu0
        %v660 = vadd.f32 0.0, %v659
        %v661 = vpop.f32.mrb[0].mxu0
        %v662 = vpop.f32.mrb[0].mxu0
        %v663 = vadd.f32 0.0, %v662
        %v664 = vpop.f32.mrb[0].mxu0
        %665 = vdwg.mxu0
        %v666 = vadd.f32 %v288, %v540
        %v667 = vadd.f32 %v289, %v543
        %v668 = vadd.f32 %v290, %v548
        %v669 = vadd.f32 %v291, %v551
        %v670 = vadd.f32 %v292, %v556
        %v671 = vadd.f32 %v293, %v559
        %v672 = vadd.f32 %v294, %v564
        %v673 = vadd.f32 %v295, %v567
        %v674 = vadd.f32 %v296, %v572
        %v675 = vadd.f32 %v297, %v575
        %v676 = vadd.f32 %v298, %v580
        %v677 = vadd.f32 %v299, %v583
        %v678 = vadd.f32 %v300, %v588
        %v679 = vadd.f32 %v301, %v591
        %v680 = vadd.f32 %v302, %v596
        %v681 = vadd.f32 %v303, %v599
        %v682 = vadd.f32 %v304, %v604
        %v683 = vadd.f32 %v305, %v607
        %v684 = vadd.f32 %v306, %v612
        %v685 = vadd.f32 %v307, %v615
        %v686 = vadd.f32 %v308, %v620
        %v687 = vadd.f32 %v309, %v623
        %v688 = vadd.f32 %v310, %v628
        %v689 = vadd.f32 %v311, %v631
        %v690 = vadd.f32 %v312, %v636
        %v691 = vadd.f32 %v313, %v639
        %v692 = vadd.f32 %v314, %v644
        %v693 = vadd.f32 %v315, %v647
        %v694 = vadd.f32 %v316, %v652
        %v695 = vadd.f32 %v317, %v655
        %v696 = vadd.f32 %v318, %v660
        %v697 = vadd.f32 %v319, %v663
        %698 = vst [vmem:[#allocation2] sm:$0xff] %v666
        %699 = vst [vmem:[#allocation2 + $0x8] sm:$0xff] %v667
        %700 = vst [vmem:[#allocation2 + $0x10] sm:$0xff] %v668
        %701 = vst [vmem:[#allocation2 + $0x18] sm:$0xff] %v669
        %702 = vst [vmem:[#allocation2 + $0x20] sm:$0xff] %v670
        %703 = vst [vmem:[#allocation2 + $0x28] sm:$0xff] %v671
        %704 = vst [vmem:[#allocation2 + $0x30] sm:$0xff] %v672
        %705 = vst [vmem:[#allocation2 + $0x38] sm:$0xff] %v673
        %706 = vst [vmem:[#allocation2 + $0x40] sm:$0xff] %v674
        %707 = vst [vmem:[#allocation2 + $0x48] sm:$0xff] %v675
        %708 = vst [vmem:[#allocation2 + $0x50] sm:$0xff] %v676
        %709 = vst [vmem:[#allocation2 + $0x58] sm:$0xff] %v677
        %710 = vst [vmem:[#allocation2 + $0x60] sm:$0xff] %v678
        %711 = vst [vmem:[#allocation2 + $0x68] sm:$0xff] %v679
        %712 = vst [vmem:[#allocation2 + $0x70] sm:$0xff] %v680
        %713 = vst [vmem:[#allocation2 + $0x78] sm:$0xff] %v681
        %714 = vst [vmem:[#allocation2 + $0x80] sm:$0xff] %v682
        %715 = vst [vmem:[#allocation2 + $0x88] sm:$0xff] %v683
        %716 = vst [vmem:[#allocation2 + $0x90] sm:$0xff] %v684
        %717 = vst [vmem:[#allocation2 + $0x98] sm:$0xff] %v685
        %718 = vst [vmem:[#allocation2 + $0xa0] sm:$0xff] %v686
        %719 = vst [vmem:[#allocation2 + $0xa8] sm:$0xff] %v687
        %720 = vst [vmem:[#allocation2 + $0xb0] sm:$0xff] %v688
        %721 = vst [vmem:[#allocation2 + $0xb8] sm:$0xff] %v689
        %722 = vst [vmem:[#allocation2 + $0xc0] sm:$0xff] %v690
        %723 = vst [vmem:[#allocation2 + $0xc8] sm:$0xff] %v691
        %724 = vst [vmem:[#allocation2 + $0xd0] sm:$0xff] %v692
        %725 = vst [vmem:[#allocation2 + $0xd8] sm:$0xff] %v693
        %726 = vst [vmem:[#allocation2 + $0xe0] sm:$0xff] %v694
        %727 = vst [vmem:[#allocation2 + $0xe8] sm:$0xff] %v695
        %728 = vst [vmem:[#allocation2 + $0xf0] sm:$0xff] %v696
        %729 = vst [vmem:[#allocation2 + $0xf8] sm:$0xff] %v697
        // Predicated region
        $region37: #{tpu_custom_call.1} parent=31 // pred_check
          %p730 = pneg %p252
        $region38: #{tpu_custom_call.1} parent=31 // pred_check_branch
          %732 = sbr.rel (%p730) target = $region40
        $region39: #{tpu_custom_call.1} parent=31 // pred_region
          %v733 = vld [vmem:[#allocation2] sm:$0xff]
          %v734 = vld [vmem:[#allocation2 + $0x8] sm:$0xff]
          %v735 = vld [vmem:[#allocation2 + $0x10] sm:$0xff]
          %v736 = vld [vmem:[#allocation2 + $0x18] sm:$0xff]
          %v737 = vld [vmem:[#allocation2 + $0x20] sm:$0xff]
          %v738 = vld [vmem:[#allocation2 + $0x28] sm:$0xff]
          %v739 = vld [vmem:[#allocation2 + $0x30] sm:$0xff]
          %v740 = vld [vmem:[#allocation2 + $0x38] sm:$0xff]
          %v741 = vld [vmem:[#allocation2 + $0x40] sm:$0xff]
          %v742 = vld [vmem:[#allocation2 + $0x48] sm:$0xff]
          %v743 = vld [vmem:[#allocation2 + $0x50] sm:$0xff]
          %v744 = vld [vmem:[#allocation2 + $0x58] sm:$0xff]
          %v745 = vld [vmem:[#allocation2 + $0x60] sm:$0xff]
          %v746 = vld [vmem:[#allocation2 + $0x68] sm:$0xff]
          %v747 = vld [vmem:[#allocation2 + $0x70] sm:$0xff]
          %v748 = vld [vmem:[#allocation2 + $0x78] sm:$0xff]
          %v749 = vld [vmem:[#allocation2 + $0x80] sm:$0xff]
          %v750 = vld [vmem:[#allocation2 + $0x88] sm:$0xff]
          %v751 = vld [vmem:[#allocation2 + $0x90] sm:$0xff]
          %v752 = vld [vmem:[#allocation2 + $0x98] sm:$0xff]
          %v753 = vld [vmem:[#allocation2 + $0xa0] sm:$0xff]
          %v754 = vld [vmem:[#allocation2 + $0xa8] sm:$0xff]
          %v755 = vld [vmem:[#allocation2 + $0xb0] sm:$0xff]
          %v756 = vld [vmem:[#allocation2 + $0xb8] sm:$0xff]
          %v757 = vld [vmem:[#allocation2 + $0xc0] sm:$0xff]
          %v758 = vld [vmem:[#allocation2 + $0xc8] sm:$0xff]
          %v759 = vld [vmem:[#allocation2 + $0xd0] sm:$0xff]
          %v760 = vld [vmem:[#allocation2 + $0xd8] sm:$0xff]
          %v761 = vld [vmem:[#allocation2 + $0xe0] sm:$0xff]
          %v762 = vld [vmem:[#allocation2 + $0xe8] sm:$0xff]
          %v763 = vld [vmem:[#allocation2 + $0xf0] sm:$0xff]
          %v764 = vld [vmem:[#allocation2 + $0xf8] sm:$0xff]
          %v765 = vld [vmem:[%s249] sm:$0x1]
          %v767 = vlaneseq
          %v768 = vshrl.u32 %v767, 7
          %v769 = vsub.s32 0, %v768
          %v770 = vrot.slane %v765, %v769
          %v772 = vadd.f32 %v733, %v770
          %v773 = vadd.f32 %v734, %v770
          %v774 = vadd.f32 %v735, %v770
          %v775 = vadd.f32 %v736, %v770
          %v776 = vadd.f32 %v737, %v770
          %v777 = vadd.f32 %v738, %v770
          %v778 = vadd.f32 %v739, %v770
          %v779 = vadd.f32 %v740, %v770
          %v780 = vadd.f32 %v741, %v770
          %v781 = vadd.f32 %v742, %v770
          %v782 = vadd.f32 %v743, %v770
          %v783 = vadd.f32 %v744, %v770
          %v784 = vadd.f32 %v745, %v770
          %v785 = vadd.f32 %v746, %v770
          %v786 = vadd.f32 %v747, %v770
          %v787 = vadd.f32 %v748, %v770
          %v788 = vadd.f32 %v749, %v770
          %v789 = vadd.f32 %v750, %v770
          %v790 = vadd.f32 %v751, %v770
          %v791 = vadd.f32 %v752, %v770
          %v792 = vadd.f32 %v753, %v770
          %v793 = vadd.f32 %v754, %v770
          %v794 = vadd.f32 %v755, %v770
          %v795 = vadd.f32 %v756, %v770
          %v796 = vadd.f32 %v757, %v770
          %v797 = vadd.f32 %v758, %v770
          %v798 = vadd.f32 %v759, %v770
          %v799 = vadd.f32 %v760, %v770
          %v800 = vadd.f32 %v761, %v770
          %v801 = vadd.f32 %v762, %v770
          %v802 = vadd.f32 %v763, %v770
          %v803 = vadd.f32 %v764, %v770
          %v804 = vmul.f32 %v772, 0.1
          %v805 = vmul.f32 %v773, 0.1
          %v806 = vmul.f32 %v774, 0.1
          %v807 = vmul.f32 %v775, 0.1
          %v808 = vmul.f32 %v776, 0.1
          %v809 = vmul.f32 %v777, 0.1
          %v810 = vmul.f32 %v778, 0.1
          %v811 = vmul.f32 %v779, 0.1
          %v812 = vmul.f32 %v780, 0.1
          %v813 = vmul.f32 %v781, 0.1
          %v814 = vmul.f32 %v782, 0.1
          %v815 = vmul.f32 %v783, 0.1
          %v816 = vmul.f32 %v784, 0.1
          %v817 = vmul.f32 %v785, 0.1
          %v818 = vmul.f32 %v786, 0.1
          %v819 = vmul.f32 %v787, 0.1
          %v820 = vmul.f32 %v788, 0.1
          %v821 = vmul.f32 %v789, 0.1
          %v822 = vmul.f32 %v790, 0.1
          %v823 = vmul.f32 %v791, 0.1
          %v824 = vmul.f32 %v792, 0.1
          %v825 = vmul.f32 %v793, 0.1
          %v826 = vmul.f32 %v794, 0.1
          %v827 = vmul.f32 %v795, 0.1
          %v828 = vmul.f32 %v796, 0.1
          %v829 = vmul.f32 %v797, 0.1
          %v830 = vmul.f32 %v798, 0.1
          %v831 = vmul.f32 %v799, 0.1
          %v832 = vmul.f32 %v800, 0.1
          %v833 = vmul.f32 %v801, 0.1
          %v834 = vmul.f32 %v802, 0.1
          %v835 = vmul.f32 %v803, 0.1
          %v836 = vmax.f32 %v772, %v804
          %v837 = vmax.f32 %v773, %v805
          %v838 = vmax.f32 %v774, %v806
          %v839 = vmax.f32 %v775, %v807
          %v840 = vmax.f32 %v776, %v808
          %v841 = vmax.f32 %v777, %v809
          %v842 = vmax.f32 %v778, %v810
          %v843 = vmax.f32 %v779, %v811
          %v844 = vmax.f32 %v780, %v812
          %v845 = vmax.f32 %v781, %v813
          %v846 = vmax.f32 %v782, %v814
          %v847 = vmax.f32 %v783, %v815
          %v848 = vmax.f32 %v784, %v816
          %v849 = vmax.f32 %v785, %v817
          %v850 = vmax.f32 %v786, %v818
          %v851 = vmax.f32 %v787, %v819
          %v852 = vmax.f32 %v788, %v820
          %v853 = vmax.f32 %v789, %v821
          %v854 = vmax.f32 %v790, %v822
          %v855 = vmax.f32 %v791, %v823
          %v856 = vmax.f32 %v792, %v824
          %v857 = vmax.f32 %v793, %v825
          %v858 = vmax.f32 %v794, %v826
          %v859 = vmax.f32 %v795, %v827
          %v860 = vmax.f32 %v796, %v828
          %v861 = vmax.f32 %v797, %v829
          %v862 = vmax.f32 %v798, %v830
          %v863 = vmax.f32 %v799, %v831
          %v864 = vmax.f32 %v800, %v832
          %v865 = vmax.f32 %v801, %v833
          %v866 = vmax.f32 %v802, %v834
          %v867 = vmax.f32 %v803, %v835
          %v868 = vpack.c.bf16 %v837, %v836
          %v869 = vpack.c.bf16 %v839, %v838
          %v870 = vpack.c.bf16 %v841, %v840
          %v871 = vpack.c.bf16 %v843, %v842
          %v872 = vpack.c.bf16 %v845, %v844
          %v873 = vpack.c.bf16 %v847, %v846
          %v874 = vpack.c.bf16 %v849, %v848
          %v875 = vpack.c.bf16 %v851, %v850
          %v876 = vpack.c.bf16 %v853, %v852
          %v877 = vpack.c.bf16 %v855, %v854
          %v878 = vpack.c.bf16 %v857, %v856
          %v879 = vpack.c.bf16 %v859, %v858
          %v880 = vpack.c.bf16 %v861, %v860
          %v881 = vpack.c.bf16 %v863, %v862
          %v882 = vpack.c.bf16 %v865, %v864
          %v883 = vpack.c.bf16 %v867, %v866
          %v900 = vunpack.c.l.b16 %v868
          %v901 = vunpack.c.h.b16 %v868
          %v902 = vunpack.c.l.b16 %v869
          %v903 = vunpack.c.h.b16 %v869
          %v904 = vunpack.c.l.b16 %v870
          %v905 = vunpack.c.h.b16 %v870
          %v906 = vunpack.c.l.b16 %v871
          %v907 = vunpack.c.h.b16 %v871
          %v908 = vunpack.c.l.b16 %v872
          %v909 = vunpack.c.h.b16 %v872
          %v910 = vunpack.c.l.b16 %v873
          %v911 = vunpack.c.h.b16 %v873
          %v912 = vunpack.c.l.b16 %v874
          %v913 = vunpack.c.h.b16 %v874
          %v914 = vunpack.c.l.b16 %v875
          %v915 = vunpack.c.h.b16 %v875
          %v916 = vunpack.c.l.b16 %v876
          %v917 = vunpack.c.h.b16 %v876
          %v918 = vunpack.c.l.b16 %v877
          %v919 = vunpack.c.h.b16 %v877
          %v920 = vunpack.c.l.b16 %v878
          %v921 = vunpack.c.h.b16 %v878
          %v922 = vunpack.c.l.b16 %v879
          %v923 = vunpack.c.h.b16 %v879
          %v924 = vunpack.c.l.b16 %v880
          %v925 = vunpack.c.h.b16 %v880
          %v926 = vunpack.c.l.b16 %v881
          %v927 = vunpack.c.h.b16 %v881
          %v928 = vunpack.c.l.b16 %v882
          %v929 = vunpack.c.h.b16 %v882
          %v930 = vunpack.c.l.b16 %v883
          %v931 = vunpack.c.h.b16 %v883
          %v932 = vpack.c.b16 %v900, %v900
          %v933 = vpack.c.b16 %v901, %v901
          %v934 = vpack.c.b16 %v902, %v902
          %v935 = vpack.c.b16 %v903, %v903
          %v936 = vpack.c.b16 %v904, %v904
          %v937 = vpack.c.b16 %v905, %v905
          %v938 = vpack.c.b16 %v906, %v906
          %v939 = vpack.c.b16 %v907, %v907
          %v940 = vpack.c.b16 %v908, %v908
          %v941 = vpack.c.b16 %v909, %v909
          %v942 = vpack.c.b16 %v910, %v910
          %v943 = vpack.c.b16 %v911, %v911
          %v944 = vpack.c.b16 %v912, %v912
          %v945 = vpack.c.b16 %v913, %v913
          %v946 = vpack.c.b16 %v914, %v914
          %v947 = vpack.c.b16 %v915, %v915
          %v948 = vpack.c.b16 %v916, %v916
          %v949 = vpack.c.b16 %v917, %v917
          %v950 = vpack.c.b16 %v918, %v918
          %v951 = vpack.c.b16 %v919, %v919
          %v952 = vpack.c.b16 %v920, %v920
          %v953 = vpack.c.b16 %v921, %v921
          %v954 = vpack.c.b16 %v922, %v922
          %v955 = vpack.c.b16 %v923, %v923
          %v956 = vpack.c.b16 %v924, %v924
          %v957 = vpack.c.b16 %v925, %v925
          %v958 = vpack.c.b16 %v926, %v926
          %v959 = vpack.c.b16 %v927, %v927
          %v960 = vpack.c.b16 %v928, %v928
          %v961 = vpack.c.b16 %v929, %v929
          %v962 = vpack.c.b16 %v930, %v930
          %v963 = vpack.c.b16 %v931, %v931
          %996 = vst [vmem:[%s228] sm:$0xf] %v932
          %997 = vst [vmem:[%s228 + $0x4] sm:$0xf] %v933
          %998 = vst [vmem:[%s228 + $0x8] sm:$0xf] %v934
          %999 = vst [vmem:[%s228 + $0xc] sm:$0xf] %v935
          %1000 = vst [vmem:[%s228 + $0x10] sm:$0xf] %v936
          %1001 = vst [vmem:[%s228 + $0x14] sm:$0xf] %v937
          %1002 = vst [vmem:[%s228 + $0x18] sm:$0xf] %v938
          %1003 = vst [vmem:[%s228 + $0x1c] sm:$0xf] %v939
          %1004 = vst [vmem:[%s228 + $0x20] sm:$0xf] %v940
          %1005 = vst [vmem:[%s228 + $0x24] sm:$0xf] %v941
          %1006 = vst [vmem:[%s228 + $0x28] sm:$0xf] %v942
          %1007 = vst [vmem:[%s228 + $0x2c] sm:$0xf] %v943
          %1008 = vst [vmem:[%s228 + $0x30] sm:$0xf] %v944
          %1009 = vst [vmem:[%s228 + $0x34] sm:$0xf] %v945
          %1010 = vst [vmem:[%s228 + $0x38] sm:$0xf] %v946
          %1011 = vst [vmem:[%s228 + $0x3c] sm:$0xf] %v947
          %1012 = vst [vmem:[%s228 + $0x40] sm:$0xf] %v948
          %1013 = vst [vmem:[%s228 + $0x44] sm:$0xf] %v949
          %1014 = vst [vmem:[%s228 + $0x48] sm:$0xf] %v950
          %1015 = vst [vmem:[%s228 + $0x4c] sm:$0xf] %v951
          %1016 = vst [vmem:[%s228 + $0x50] sm:$0xf] %v952
          %1017 = vst [vmem:[%s228 + $0x54] sm:$0xf] %v953
          %1018 = vst [vmem:[%s228 + $0x58] sm:$0xf] %v954
          %1019 = vst [vmem:[%s228 + $0x5c] sm:$0xf] %v955
          %1020 = vst [vmem:[%s228 + $0x60] sm:$0xf] %v956
          %1021 = vst [vmem:[%s228 + $0x64] sm:$0xf] %v957
          %1022 = vst [vmem:[%s228 + $0x68] sm:$0xf] %v958
          %1023 = vst [vmem:[%s228 + $0x6c] sm:$0xf] %v959
          %1024 = vst [vmem:[%s228 + $0x70] sm:$0xf] %v960
          %1025 = vst [vmem:[%s228 + $0x74] sm:$0xf] %v961
          %1026 = vst [vmem:[%s228 + $0x78] sm:$0xf] %v962
          %1027 = vst [vmem:[%s228 + $0x7c] sm:$0xf] %v963
        $region40: #{tpu_custom_call.1} parent=31 // pred_fallthru
          _
        %s1028 = sand.u32 %s128, 1
        %s1029 = scalar_lea.sflag [#allocation4], %s1028
        %s1030 = sand.u32 %s128, 1
        %s1031 = smul.addr %s1030, 128
        %s1032 = scalar_lea.vmem [#allocation3], %s1031
        // Predicated region
        $region41: #{tpu_custom_call.1} parent=31 // pred_check
          %p1033 = pneg %p138
        $region42: #{tpu_custom_call.1} parent=31 // pred_check_branch
          %1035 = sbr.rel (%p1033) target = $region44
        $region43: #{tpu_custom_call.1} parent=31 // pred_region
          %s1036 = smul.u32 32, %s22
          %s1038 = ssub.s32 2048, 2048
          %1039 = vsyncadd %s1029, %s1038
          %s1040 = sadd.s32 %s23, %s1036
          %s1041 = smul.addr %s1040, 64
          %s1042 = scalar_lea.hbm %s3, %s1041
          %s1043 = sshll.u32 %s1032, 4
          %s1044 = int_to_ptr.vmem [resolvable:$true] %s1043
          %1049 = dma.vmem_to_hbm [thread:$0]  %s1044, 2048, %s1042, %s1029, 64, 64, 4
        $region44: #{tpu_custom_call.1} parent=31 // pred_fallthru
          _
      $region32: #{tpu_custom_call.1} parent=5 // pred_fallthru
        _
      %p1050 = scmp.le.s32.totalorder 2, %s12
      // Predicated region
      $region45: #{tpu_custom_call.1} parent=5 // pred_check
        %p1051 = pneg %p1050
      $region46: #{tpu_custom_call.1} parent=5 // pred_check_branch
        %1053 = sbr.rel (%p1051) target = $region48
      $region47: #{tpu_custom_call.1} parent=5 // pred_region
        %s1054 = ssub.s32 %s12, 2
        // Predicated region
        $region49: #{tpu_custom_call.1} parent=47 // pred_check
          %p1055 = pneg %p144
        $region50: #{tpu_custom_call.1} parent=47 // pred_check_branch
          %1057 = sbr.rel (%p1055) target = $region52
        $region51: #{tpu_custom_call.1} parent=47 // pred_region
          %s1058 = sand.u32 %s129, 1
          %s1059 = scalar_lea.sflag [#allocation4], %s1058
          %s1060 = sand.u32 %s129, 1
          %s1061 = smul.addr %s1060, 128
          %s1062 = scalar_lea.vmem [#allocation3], %s1061
          %1063 = dma.done %s1059, 2048
        $region52: #{tpu_custom_call.1} parent=47 // pred_fallthru
          _
      $region48: #{tpu_custom_call.1} parent=5 // pred_fallthru
        _
    $region6: #{tpu_custom_call.1} parent=1 // loop_footer
      %s16 = sadd.s32 1, %s12
    $region7: #{tpu_custom_call.1} parent=1 // loop_footer_branch
      %11 = sbr.rel target = $region3
    $region8: #{tpu_custom_call.1} parent=1 // loop_exit
      _
    %1064 = vsyncpa [#allocation4], 1
    %s1065 = scalar_lea.sflag [#allocation4], 1
    %1066 = vsyncpa %s1065, 1

</llo_original>
